<compile_context>
chip_gen: v5e
topology: v5e:2x2
jax: 0.10.0
libtpu: 0.0.40
codegen_flags: <defaults>
</compile_context>

<pallas_src>
import jax
import jax.numpy as jnp
from jax import lax
from jax.experimental import pallas as pl
from jax.experimental.pallas import tpu as pltpu

_LN_EPS = 1e-5


def _decoder_stack_kernel(tgt_ref, mem_ref,
                          w1_ref, b1_ref, g1_ref, be1_ref,
                          w2_ref, b2_ref, g2_ref, be2_ref,
                          embq_ref, embk_ref, wfc1_ref, wfc2_ref, bias_ref,
                          out_ref):
    """Computes one (q_tile, k_tile) block of the layer-summed decoder score."""
    num_layers = tgt_ref.shape[0]
    qthw = tgt_ref.shape[1]          # q_tile * h*w
    kthw = mem_ref.shape[1]          # k_tile * h*w
    df = w1_ref.shape[2]
    q_t = wfc1_ref.shape[1]
    k_t = wfc2_ref.shape[1]
    hw = embq_ref.shape[1]

    # A @ B.T contraction (contract last dims of both).
    dn_nt = (((1,), (1,)), ((), ()))
    # TODO(synk): check the MLIR for an inserted transpose feeding the vmatmul; if present, emit
    # the K slab pre-transposed as (df, rows) from linear_ln instead.

    def linear_ln(x, w, b, gamma, beta):
        # bf16 MXU operands, f32 accumulate; centered two-pass LayerNorm stats (f32 VPU).
        y = jnp.dot(x, w, preferred_element_type=jnp.float32) + b
        inv_d = 1.0 / df
        mu = jnp.sum(y, axis=-1, keepdims=True) * inv_d
        yc = y - mu
        var = jnp.sum(yc * yc, axis=-1, keepdims=True) * inv_d
        return yc * lax.rsqrt(var + _LN_EPS) * gamma + beta

    acc = jnp.zeros((q_t, k_t), jnp.float32)
    # TODO(synk): if num_layers grows beyond ~4, switch to lax.fori_loop(..., unroll=True) with
    # `acc` as the carry so vreg live ranges stay bounded (spills land on the single vst slot).
    for layer in range(num_layers):            # small & static -> unrolled at trace time
        x2 = linear_ln(tgt_ref[layer], w1_ref[layer], b1_ref[layer],
                       g1_ref[layer], be1_ref[layer])                       # (q_t*hw, df) f32
        y2 = linear_ln(mem_ref[layer], w2_ref[layer], b2_ref[layer],
                       g2_ref[layer], be2_ref[layer])                       # (k_t*hw, df) f32
        xb = x2.astype(tgt_ref.dtype)
        yb = y2.astype(mem_ref.dtype)

        # One score matmul per orientation so BOTH GMP maxes are sublane-group reductions.
        # TODO(synk): on v5e (slow MXU, 3 XLUs) drop s_kq and derive m_s by XLU-transposing the
        # embedded s_qk slab; keep both orientations on v6e/v7x (verify via bundle dump).
        s_qk = lax.dot_general(xb, yb, dn_nt, preferred_element_type=jnp.float32)  # (q_t*hw, k_t*hw)
        s_kq = lax.dot_general(yb, xb, dn_nt, preferred_element_type=jnp.float32)  # (k_t*hw, q_t*hw)

        # Fused score_embed multiply + GMP max.  The reshape splits only the sublane dim
        # (hw % 8 == 0), so it is layout preserving; emb slabs are hw-tall, not q*hw / k*hw tall.
        #   m_t[a, b*hw+s] = max_t score[a,b,s,t]      (torch score.max(dim=3))
        #   m_s[b, a*hw+t] = max_s score[a,b,s,t]      (torch score.max(dim=2))
        m_t = jnp.max(s_qk.reshape(q_t, hw, kthw) * embq_ref[layer][None], axis=1)  # (q_t, k_t*hw)
        m_s = jnp.max(s_kq.reshape(k_t, hw, qthw) * embk_ref[layer][None], axis=1)  # (k_t, q_t*hw)

        # fc: bf16 block-diagonal weight matmuls produce the (q_t, k_t) tile directly.
        r1 = lax.dot_general(wfc1_ref[layer], m_s.astype(wfc1_ref.dtype), dn_nt,
                             preferred_element_type=jnp.float32)            # (q_t, k_t) fc[:, :hw]
        r2 = lax.dot_general(m_t.astype(wfc2_ref.dtype), wfc2_ref[layer], dn_nt,
                             preferred_element_type=jnp.float32)            # (q_t, k_t) fc[:, hw:]
        acc = acc + r1 + r2

    out_ref[...] = acc + bias_ref[0]            # summed per-layer fc bias (SMEM scalar)


def transformer_decoder(tgt, memory, params, *, num_layers, h, w, norm_fn=None,
                        use_bf16=True, q_tile=None, k_tile=None):
    """JAX/Pallas equivalent of TransMatcher TransformerDecoder.forward."""
    q = tgt.shape[0]
    k = memory.shape[0]
    hw = h * w
    d = tgt.shape[-1] // num_layers
    n = num_layers
    assert hw % 8 == 0, "h*w must be a multiple of 8 for the sublane-group reductions"

    mm_dtype = jnp.bfloat16 if use_bf16 else jnp.float32

    # ---- tile sizing: target ~q_t*hw x k_t*hw f32 score slabs that fit v7x's 64 MiB VMEM ----
    def _pick(total, target_rows):
        t = min(total, max(1, target_rows // hw))
        while total % t:
            t -= 1
        return t
    q_t = q_tile if q_tile is not None else _pick(q, 1024)
    k_t = k_tile if k_tile is not None else _pick(k, 2048)
    assert q % q_t == 0 and k % k_t == 0
    # (8,128) block constraints + lane-dense output tile whenever the dim is actually split.
    assert q_t == q or (q_t % 8 == 0 and (q_t * hw) % 128 == 0), "bad q tile for TPU layout"
    assert k_t == k or (k_t % 128 == 0 and (k_t * hw) % 128 == 0), "bad k tile for TPU layout"
    # TODO(synk): for galleries where no k tile satisfies the constraint, switch the out block to
    # full-k with ki marked 'arbitrary' (or pad k) instead of tightening this assert.
    grid = (q // q_t, k // k_t)

    # ---- glue (layout plumbing done by XLA outside the kernel) ----
    tgt_l = jnp.stack([c.reshape(q * hw, d)
                       for c in jnp.split(tgt, n, axis=-1)]).astype(mm_dtype)
    mem_l = jnp.stack([c.reshape(k * hw, d)
                       for c in jnp.split(memory, n, axis=-1)]).astype(mm_dtype)
    w1 = params['w1'].astype(mm_dtype)
    w2 = params['w2'].astype(mm_dtype)
    df = w1.shape[-1]

    # score_embed as hw-tall column-tiled slabs (k x / q x smaller than full-slab multipliers).
    embT = params['embT']                      # (n, hw, hw), embT[l, t, s] = score_embed[l][s, t]
    emb = jnp.swapaxes(embT, -1, -2)           # score_embed[l][s, t]
    emb_q = jnp.tile(embT, (1, 1, k))          # (n, hw, k*hw): [l, t, b*hw+s] = score_embed[s, t]
    emb_k = jnp.tile(emb, (1, 1, q))           # (n, hw, q*hw): [l, s, a*hw+t] = score_embed[s, t]

    # fc weights as bf16 block-diagonal matrices; BlockSpec only DMAs the diagonal (tile) block.
    wfc1 = params['wfc1'][:, 0, :]             # (n, hw)   fc.weight[:, :hw]
    wfc2 = params['wfc2'][:, 0, :]             # (n, hw)   fc.weight[:, hw:]
    w1blk = jnp.einsum('ab,lt->labt', jnp.eye(q, dtype=jnp.float32),
                       wfc1).reshape(n, q, q * hw).astype(mm_dtype)         # (n, q, q*hw)
    w2blk = jnp.einsum('ab,ls->labs', jnp.eye(k, dtype=jnp.float32),
                       wfc2).reshape(n, k, k * hw).astype(mm_dtype)         # (n, k, k*hw)
    bias_sum = jnp.sum(params['bfc']).reshape(1).astype(jnp.float32)        # scalar -> SMEM

    in_specs = [
        pl.BlockSpec((n, q_t * hw, d), lambda qi, ki: (0, qi, 0)),      # tgt rows
        pl.BlockSpec((n, k_t * hw, d), lambda qi, ki: (0, ki, 0)),      # memory rows
        pl.BlockSpec((n, d, df), lambda qi, ki: (0, 0, 0)),             # w1
        pl.BlockSpec((n, 1, df), lambda qi, ki: (0, 0, 0)),             # b1
        pl.BlockSpec((n, 1, df), lambda qi, ki: (0, 0, 0)),             # g1
        pl.BlockSpec((n, 1, df), lambda qi, ki: (0, 0, 0)),             # be1
        pl.BlockSpec((n, d, df), lambda qi, ki: (0, 0, 0)),             # w2
        pl.BlockSpec((n, 1, df), lambda qi, ki: (0, 0, 0)),             # b2
        pl.BlockSpec((n, 1, df), lambda qi, ki: (0, 0, 0)),             # g2
        pl.BlockSpec((n, 1, df), lambda qi, ki: (0, 0, 0)),             # be2
        pl.BlockSpec((n, hw, k_t * hw), lambda qi, ki: (0, 0, ki)),     # emb slab (qk orientation)
        pl.BlockSpec((n, hw, q_t * hw), lambda qi, ki: (0, 0, qi)),     # emb slab (kq orientation)
        pl.BlockSpec((n, q_t, q_t * hw), lambda qi, ki: (0, qi, qi)),   # fc block-diag (q side)
        pl.BlockSpec((n, k_t, k_t * hw), lambda qi, ki: (0, ki, ki)),   # fc block-diag (k side)
        pl.BlockSpec(memory_space=pltpu.SMEM),                          # summed fc bias scalar
    ]
    out_specs = pl.BlockSpec((q_t, k_t), lambda qi, ki: (qi, ki))

    score = pl.pallas_call(
        _decoder_stack_kernel,
        out_shape=jax.ShapeDtypeStruct((q, k), jnp.float32),
        grid=grid,
        in_specs=in_specs,
        out_specs=out_specs,
        compiler_params=pltpu.CompilerParams(
            # Each output tile is written exactly once (layer loop is inside the kernel), so both
            # axes are 'parallel' -> megacore sharding on v7x; near-neutral on v5e/v6e.
            dimension_semantics=("parallel", "parallel"),
            # Above the 32 MiB scoped default, with headroom under v7x's 64 MiB physical VMEM.
            vmem_limit_bytes=48 * 1024 * 1024,
        ),
    )(tgt_l, mem_l,
      w1, params['b1'], params['g1'], params['be1'],
      w2, params['b2'], params['g2'], params['be2'],
      emb_q, emb_k, w1blk, w2blk, bias_sum)

    if norm_fn is not None:
        # Matches: score.view(-1, 1) -> norm -> view(q, k)   (e.g. BatchNorm1d(1))
        score = norm_fn(score.reshape(-1, 1)).reshape(q, k)
    return score


def init_params(key, num_layers, d_model, dim_ff, hw):
    ks = jax.random.split(key, 4)

    def xavier(k, shape):
        fan_in, fan_out = shape[-2], shape[-1]
        lim = (6.0 / (fan_in + fan_out)) ** 0.5
        return jax.random.uniform(k, shape, jnp.float32, -lim, lim)

    n = num_layers
    score_embed = jax.random.uniform(ks[2], (n, hw, hw), jnp.float32)        # torch.rand-like
    wfc = xavier(ks[3], (n, 1, 2 * hw))
    return {
        'w1': xavier(ks[0], (n, d_model, dim_ff)),
        'b1': jnp.zeros((n, 1, dim_ff), jnp.float32),
        'g1': jnp.ones((n, 1, dim_ff), jnp.float32),
        'be1': jnp.zeros((n, 1, dim_ff), jnp.float32),
        'w2': xavier(ks[1], (n, d_model, dim_ff)),
        'b2': jnp.zeros((n, 1, dim_ff), jnp.float32),
        'g2': jnp.ones((n, 1, dim_ff), jnp.float32),
        'be2': jnp.zeros((n, 1, dim_ff), jnp.float32),
        'embT': jnp.swapaxes(score_embed, -1, -2),   # embT[t, s] = score_embed[s, t]
        'wfc1': wfc[:, :, :hw],
        'wfc2': wfc[:, :, hw:],
        'bfc': jnp.zeros((n, 1, 1), jnp.float32),
    }


if __name__ == "__main__":
    key = jax.random.PRNGKey(0)
    k_tgt, k_mem, k_par = jax.random.split(key, 3)

    num_layers = 2
    d_model = 32          # per-layer feature dim  -> input channel dim is d_model * num_layers
    dim_ff = 64
    h, w = 4, 4           # feature-map size, h*w = 16 (seq_len of the score embedding)
    q_len, k_len = 4, 6   # query length, memory (gallery) length

    tgt = jax.random.normal(k_tgt, (q_len, h, w, d_model * num_layers), jnp.float32)
    memory = jax.random.normal(k_mem, (k_len, h, w, d_model * num_layers), jnp.float32)
    params = init_params(k_par, num_layers, d_model, dim_ff, h * w)

    # norm=None is the TransformerDecoder default; pass a callable to exercise the norm branch.
    score = transformer_decoder(tgt, memory, params,
                                num_layers=num_layers, h=h, w=w, norm_fn=None)
    jax.block_until_ready(score)
    assert score.shape == (q_len, k_len) and score.dtype == jnp.float32
    print("KERNEL_OK")
</pallas_src>

<mosaic_0001>
module attributes {stable_mosaic.version = 11 : i64} {
  func.func @_decoder_stack_kernel(%arg0: i32, %arg1: i32, %arg2: memref<2x64x32xbf16, #tpu.memory_space<vmem>>, %arg3: memref<2x96x32xbf16, #tpu.memory_space<vmem>>, %arg4: memref<2x32x64xbf16, #tpu.memory_space<vmem>>, %arg5: memref<2x1x64xf32, #tpu.memory_space<vmem>>, %arg6: memref<2x1x64xf32, #tpu.memory_space<vmem>>, %arg7: memref<2x1x64xf32, #tpu.memory_space<vmem>>, %arg8: memref<2x32x64xbf16, #tpu.memory_space<vmem>>, %arg9: memref<2x1x64xf32, #tpu.memory_space<vmem>>, %arg10: memref<2x1x64xf32, #tpu.memory_space<vmem>>, %arg11: memref<2x1x64xf32, #tpu.memory_space<vmem>>, %arg12: memref<2x16x96xf32, #tpu.memory_space<vmem>>, %arg13: memref<2x16x64xf32, #tpu.memory_space<vmem>>, %arg14: memref<2x4x64xbf16, #tpu.memory_space<vmem>>, %arg15: memref<2x6x96xbf16, #tpu.memory_space<vmem>>, %arg16: memref<1xf32, #tpu.memory_space<smem>>, %arg17: memref<4x6xf32, #tpu.memory_space<vmem>>) attributes {dimension_semantics = [#tpu.dimension_semantics<parallel>, #tpu.dimension_semantics<parallel>], iteration_bounds = array<i64: 1, 1>, scalar_prefetch = 0 : i64, scratch_operands = 0 : i64, tpu.core_type = #tpu.core_type<tc>, window_params = [{transform_indices = @transform_0, window_bounds = array<i64: 2, 64, 32>}, {transform_indices = @transform_1, window_bounds = array<i64: 2, 96, 32>}, {pipeline_mode = #tpu.pipeline_mode<synchronous>, transform_indices = @transform_2, window_bounds = array<i64: 2, 32, 64>}, {pipeline_mode = #tpu.pipeline_mode<synchronous>, transform_indices = @transform_3, window_bounds = array<i64: 2, 1, 64>}, {pipeline_mode = #tpu.pipeline_mode<synchronous>, transform_indices = @transform_4, window_bounds = array<i64: 2, 1, 64>}, {pipeline_mode = #tpu.pipeline_mode<synchronous>, transform_indices = @transform_5, window_bounds = array<i64: 2, 1, 64>}, {pipeline_mode = #tpu.pipeline_mode<synchronous>, transform_indices = @transform_6, window_bounds = array<i64: 2, 32, 64>}, {pipeline_mode = #tpu.pipeline_mode<synchronous>, transform_indices = @transform_7, window_bounds = array<i64: 2, 1, 64>}, {pipeline_mode = #tpu.pipeline_mode<synchronous>, transform_indices = @transform_8, window_bounds = array<i64: 2, 1, 64>}, {pipeline_mode = #tpu.pipeline_mode<synchronous>, transform_indices = @transform_9, window_bounds = array<i64: 2, 1, 64>}, {transform_indices = @transform_10, window_bounds = array<i64: 2, 16, 96>}, {transform_indices = @transform_11, window_bounds = array<i64: 2, 16, 64>}, {transform_indices = @transform_12, window_bounds = array<i64: 2, 4, 64>}, {transform_indices = @transform_13, window_bounds = array<i64: 2, 6, 96>}, {transform_indices = @transform_14, window_bounds = array<i64: 1>}, {transform_indices = @transform_15, window_bounds = array<i64: 4, 6>}]} {
    %cst = arith.constant 0.000000e+00 : f32
    %0 = vector.broadcast %cst : f32 to vector<4x6xf32>
    %c0 = arith.constant 0 : index
    %c0_0 = arith.constant 0 : index
    %c0_1 = arith.constant 0 : index
    %1 = vector.load %arg2[%c0, %c0_0, %c0_1] : memref<2x64x32xbf16, #tpu.memory_space<vmem>>, vector<1x64x32xbf16>
    %2 = vector.shape_cast %1 : vector<1x64x32xbf16> to vector<64x32xbf16>
    %c0_2 = arith.constant 0 : index
    %c0_3 = arith.constant 0 : index
    %c0_4 = arith.constant 0 : index
    %3 = vector.load %arg4[%c0_2, %c0_3, %c0_4] : memref<2x32x64xbf16, #tpu.memory_space<vmem>>, vector<1x32x64xbf16>
    %4 = vector.shape_cast %3 : vector<1x32x64xbf16> to vector<32x64xbf16>
    %c0_5 = arith.constant 0 : index
    %c0_6 = arith.constant 0 : index
    %c0_7 = arith.constant 0 : index
    %5 = vector.load %arg5[%c0_5, %c0_6, %c0_7] : memref<2x1x64xf32, #tpu.memory_space<vmem>>, vector<1x1x64xf32>
    %6 = vector.shape_cast %5 : vector<1x1x64xf32> to vector<1x64xf32>
    %c0_8 = arith.constant 0 : index
    %c0_9 = arith.constant 0 : index
    %c0_10 = arith.constant 0 : index
    %7 = vector.load %arg6[%c0_8, %c0_9, %c0_10] : memref<2x1x64xf32, #tpu.memory_space<vmem>>, vector<1x1x64xf32>
    %8 = vector.shape_cast %7 : vector<1x1x64xf32> to vector<1x64xf32>
    %c0_11 = arith.constant 0 : index
    %c0_12 = arith.constant 0 : index
    %c0_13 = arith.constant 0 : index
    %9 = vector.load %arg7[%c0_11, %c0_12, %c0_13] : memref<2x1x64xf32, #tpu.memory_space<vmem>>, vector<1x1x64xf32>
    %10 = vector.shape_cast %9 : vector<1x1x64xf32> to vector<1x64xf32>
    %cst_14 = arith.constant dense<0.000000e+00> : vector<64x64xf32>
    %11 = tpu.matmul %2, %4, %cst_14 {dimension_numbers = #tpu.dot_dimension_numbers<[1], [0], [0], [1], [0, 0, 1, 1], [], []>} : vector<64x32xbf16>, vector<32x64xbf16>, vector<64x64xf32> -> vector<64x64xf32>
    %12 = vector.broadcast %6 : vector<1x64xf32> to vector<64x64xf32>
    %13 = arith.addf %11, %12 : vector<64x64xf32>
    %cst_15 = arith.constant dense<0.000000e+00> : vector<64xf32>
    %14 = vector.multi_reduction <add>, %13, %cst_15 [1] : vector<64x64xf32> to vector<64xf32>
    %15 = vector.shape_cast %14 : vector<64xf32> to vector<64x1xf32>
    %cst_16 = arith.constant 1.562500e-02 : f32
    %16 = vector.broadcast %cst_16 : f32 to vector<64x1xf32>
    %17 = arith.mulf %15, %16 : vector<64x1xf32>
    %18 = vector.broadcast %17 : vector<64x1xf32> to vector<64x64xf32>
    %19 = arith.subf %13, %18 : vector<64x64xf32>
    %20 = arith.mulf %19, %19 : vector<64x64xf32>
    %cst_17 = arith.constant dense<0.000000e+00> : vector<64xf32>
    %21 = vector.multi_reduction <add>, %20, %cst_17 [1] : vector<64x64xf32> to vector<64xf32>
    %22 = vector.shape_cast %21 : vector<64xf32> to vector<64x1xf32>
    %cst_18 = arith.constant 1.562500e-02 : f32
    %23 = vector.broadcast %cst_18 : f32 to vector<64x1xf32>
    %24 = arith.mulf %22, %23 : vector<64x1xf32>
    %cst_19 = arith.constant 9.99999974E-6 : f32
    %25 = vector.broadcast %cst_19 : f32 to vector<64x1xf32>
    %26 = arith.addf %24, %25 : vector<64x1xf32>
    %27 = math.rsqrt %26 : vector<64x1xf32>
    %28 = vector.broadcast %27 : vector<64x1xf32> to vector<64x64xf32>
    %29 = arith.mulf %19, %28 : vector<64x64xf32>
    %30 = vector.broadcast %8 : vector<1x64xf32> to vector<64x64xf32>
    %31 = arith.mulf %29, %30 : vector<64x64xf32>
    %32 = vector.broadcast %10 : vector<1x64xf32> to vector<64x64xf32>
    %33 = arith.addf %31, %32 : vector<64x64xf32>
    %c0_20 = arith.constant 0 : index
    %c0_21 = arith.constant 0 : index
    %c0_22 = arith.constant 0 : index
    %34 = vector.load %arg3[%c0_20, %c0_21, %c0_22] : memref<2x96x32xbf16, #tpu.memory_space<vmem>>, vector<1x96x32xbf16>
    %35 = vector.shape_cast %34 : vector<1x96x32xbf16> to vector<96x32xbf16>
    %c0_23 = arith.constant 0 : index
    %c0_24 = arith.constant 0 : index
    %c0_25 = arith.constant 0 : index
    %36 = vector.load %arg8[%c0_23, %c0_24, %c0_25] : memref<2x32x64xbf16, #tpu.memory_space<vmem>>, vector<1x32x64xbf16>
    %37 = vector.shape_cast %36 : vector<1x32x64xbf16> to vector<32x64xbf16>
    %c0_26 = arith.constant 0 : index
    %c0_27 = arith.constant 0 : index
    %c0_28 = arith.constant 0 : index
    %38 = vector.load %arg9[%c0_26, %c0_27, %c0_28] : memref<2x1x64xf32, #tpu.memory_space<vmem>>, vector<1x1x64xf32>
    %39 = vector.shape_cast %38 : vector<1x1x64xf32> to vector<1x64xf32>
    %c0_29 = arith.constant 0 : index
    %c0_30 = arith.constant 0 : index
    %c0_31 = arith.constant 0 : index
    %40 = vector.load %arg10[%c0_29, %c0_30, %c0_31] : memref<2x1x64xf32, #tpu.memory_space<vmem>>, vector<1x1x64xf32>
    %41 = vector.shape_cast %40 : vector<1x1x64xf32> to vector<1x64xf32>
    %c0_32 = arith.constant 0 : index
    %c0_33 = arith.constant 0 : index
    %c0_34 = arith.constant 0 : index
    %42 = vector.load %arg11[%c0_32, %c0_33, %c0_34] : memref<2x1x64xf32, #tpu.memory_space<vmem>>, vector<1x1x64xf32>
    %43 = vector.shape_cast %42 : vector<1x1x64xf32> to vector<1x64xf32>
    %cst_35 = arith.constant dense<0.000000e+00> : vector<96x64xf32>
    %44 = tpu.matmul %35, %37, %cst_35 {dimension_numbers = #tpu.dot_dimension_numbers<[1], [0], [0], [1], [0, 0, 1, 1], [], []>} : vector<96x32xbf16>, vector<32x64xbf16>, vector<96x64xf32> -> vector<96x64xf32>
    %45 = vector.broadcast %39 : vector<1x64xf32> to vector<96x64xf32>
    %46 = arith.addf %44, %45 : vector<96x64xf32>
    %cst_36 = arith.constant dense<0.000000e+00> : vector<96xf32>
    %47 = vector.multi_reduction <add>, %46, %cst_36 [1] : vector<96x64xf32> to vector<96xf32>
    %48 = vector.shape_cast %47 : vector<96xf32> to vector<96x1xf32>
    %cst_37 = arith.constant 1.562500e-02 : f32
    %49 = vector.broadcast %cst_37 : f32 to vector<96x1xf32>
    %50 = arith.mulf %48, %49 : vector<96x1xf32>
    %51 = vector.broadcast %50 : vector<96x1xf32> to vector<96x64xf32>
    %52 = arith.subf %46, %51 : vector<96x64xf32>
    %53 = arith.mulf %52, %52 : vector<96x64xf32>
    %cst_38 = arith.constant dense<0.000000e+00> : vector<96xf32>
    %54 = vector.multi_reduction <add>, %53, %cst_38 [1] : vector<96x64xf32> to vector<96xf32>
    %55 = vector.shape_cast %54 : vector<96xf32> to vector<96x1xf32>
    %cst_39 = arith.constant 1.562500e-02 : f32
    %56 = vector.broadcast %cst_39 : f32 to vector<96x1xf32>
    %57 = arith.mulf %55, %56 : vector<96x1xf32>
    %cst_40 = arith.constant 9.99999974E-6 : f32
    %58 = vector.broadcast %cst_40 : f32 to vector<96x1xf32>
    %59 = arith.addf %57, %58 : vector<96x1xf32>
    %60 = math.rsqrt %59 : vector<96x1xf32>
    %61 = vector.broadcast %60 : vector<96x1xf32> to vector<96x64xf32>
    %62 = arith.mulf %52, %61 : vector<96x64xf32>
    %63 = vector.broadcast %41 : vector<1x64xf32> to vector<96x64xf32>
    %64 = arith.mulf %62, %63 : vector<96x64xf32>
    %65 = vector.broadcast %43 : vector<1x64xf32> to vector<96x64xf32>
    %66 = arith.addf %64, %65 : vector<96x64xf32>
    %67 = arith.truncf %33 : vector<64x64xf32> to vector<64x64xbf16>
    %68 = arith.truncf %66 : vector<96x64xf32> to vector<96x64xbf16>
    %cst_41 = arith.constant dense<0.000000e+00> : vector<64x96xf32>
    %69 = tpu.matmul %67, %68, %cst_41 {dimension_numbers = #tpu.dot_dimension_numbers<[1], [1], [0], [0], [0, 0, 1, 0], [], []>} : vector<64x64xbf16>, vector<96x64xbf16>, vector<64x96xf32> -> vector<64x96xf32>
    %cst_42 = arith.constant dense<0.000000e+00> : vector<96x64xf32>
    %70 = tpu.matmul %68, %67, %cst_42 {dimension_numbers = #tpu.dot_dimension_numbers<[1], [1], [0], [0], [0, 0, 1, 0], [], []>} : vector<96x64xbf16>, vector<64x64xbf16>, vector<96x64xf32> -> vector<96x64xf32>
    %71 = vector.shape_cast %69 : vector<64x96xf32> to vector<4x16x96xf32>
    %c0_43 = arith.constant 0 : index
    %c0_44 = arith.constant 0 : index
    %c0_45 = arith.constant 0 : index
    %72 = vector.load %arg12[%c0_43, %c0_44, %c0_45] : memref<2x16x96xf32, #tpu.memory_space<vmem>>, vector<1x16x96xf32>
    %73 = vector.shape_cast %72 : vector<1x16x96xf32> to vector<16x96xf32>
    %74 = vector.shape_cast %73 : vector<16x96xf32> to vector<1x16x96xf32>
    %75 = vector.broadcast %74 : vector<1x16x96xf32> to vector<4x16x96xf32>
    %76 = arith.mulf %71, %75 : vector<4x16x96xf32>
    %cst_46 = arith.constant dense<0xFF800000> : vector<4x96xf32>
    %77 = vector.multi_reduction <maximumf>, %76, %cst_46 [1] : vector<4x16x96xf32> to vector<4x96xf32>
    %78 = vector.shape_cast %70 : vector<96x64xf32> to vector<6x16x64xf32>
    %c0_47 = arith.constant 0 : index
    %c0_48 = arith.constant 0 : index
    %c0_49 = arith.constant 0 : index
    %79 = vector.load %arg13[%c0_47, %c0_48, %c0_49] : memref<2x16x64xf32, #tpu.memory_space<vmem>>, vector<1x16x64xf32>
    %80 = vector.shape_cast %79 : vector<1x16x64xf32> to vector<16x64xf32>
    %81 = vector.shape_cast %80 : vector<16x64xf32> to vector<1x16x64xf32>
    %82 = vector.broadcast %81 : vector<1x16x64xf32> to vector<6x16x64xf32>
    %83 = arith.mulf %78, %82 : vector<6x16x64xf32>
    %cst_50 = arith.constant dense<0xFF800000> : vector<6x64xf32>
    %84 = vector.multi_reduction <maximumf>, %83, %cst_50 [1] : vector<6x16x64xf32> to vector<6x64xf32>
    %c0_51 = arith.constant 0 : index
    %c0_52 = arith.constant 0 : index
    %c0_53 = arith.constant 0 : index
    %85 = vector.load %arg14[%c0_51, %c0_52, %c0_53] : memref<2x4x64xbf16, #tpu.memory_space<vmem>>, vector<1x4x64xbf16>
    %86 = vector.shape_cast %85 : vector<1x4x64xbf16> to vector<4x64xbf16>
    %87 = arith.truncf %84 : vector<6x64xf32> to vector<6x64xbf16>
    %cst_54 = arith.constant dense<0.000000e+00> : vector<4x6xf32>
    %88 = tpu.matmul %86, %87, %cst_54 {dimension_numbers = #tpu.dot_dimension_numbers<[1], [1], [0], [0], [0, 0, 1, 0], [], []>} : vector<4x64xbf16>, vector<6x64xbf16>, vector<4x6xf32> -> vector<4x6xf32>
    %89 = arith.truncf %77 : vector<4x96xf32> to vector<4x96xbf16>
    %c0_55 = arith.constant 0 : index
    %c0_56 = arith.constant 0 : index
    %c0_57 = arith.constant 0 : index
    %90 = vector.load %arg15[%c0_55, %c0_56, %c0_57] : memref<2x6x96xbf16, #tpu.memory_space<vmem>>, vector<1x6x96xbf16>
    %91 = vector.shape_cast %90 : vector<1x6x96xbf16> to vector<6x96xbf16>
    %cst_58 = arith.constant dense<0.000000e+00> : vector<4x6xf32>
    %92 = tpu.matmul %89, %91, %cst_58 {dimension_numbers = #tpu.dot_dimension_numbers<[1], [1], [0], [0], [0, 0, 1, 0], [], []>} : vector<4x96xbf16>, vector<6x96xbf16>, vector<4x6xf32> -> vector<4x6xf32>
    %93 = arith.addf %0, %88 : vector<4x6xf32>
    %94 = arith.addf %93, %92 : vector<4x6xf32>
    %c1 = arith.constant 1 : index
    %c0_59 = arith.constant 0 : index
    %c0_60 = arith.constant 0 : index
    %95 = vector.load %arg2[%c1, %c0_59, %c0_60] : memref<2x64x32xbf16, #tpu.memory_space<vmem>>, vector<1x64x32xbf16>
    %96 = vector.shape_cast %95 : vector<1x64x32xbf16> to vector<64x32xbf16>
    %c1_61 = arith.constant 1 : index
    %c0_62 = arith.constant 0 : index
    %c0_63 = arith.constant 0 : index
    %97 = vector.load %arg4[%c1_61, %c0_62, %c0_63] : memref<2x32x64xbf16, #tpu.memory_space<vmem>>, vector<1x32x64xbf16>
    %98 = vector.shape_cast %97 : vector<1x32x64xbf16> to vector<32x64xbf16>
    %c1_64 = arith.constant 1 : index
    %c0_65 = arith.constant 0 : index
    %c0_66 = arith.constant 0 : index
    %99 = vector.load %arg5[%c1_64, %c0_65, %c0_66] : memref<2x1x64xf32, #tpu.memory_space<vmem>>, vector<1x1x64xf32>
    %100 = vector.shape_cast %99 : vector<1x1x64xf32> to vector<1x64xf32>
    %c1_67 = arith.constant 1 : index
    %c0_68 = arith.constant 0 : index
    %c0_69 = arith.constant 0 : index
    %101 = vector.load %arg6[%c1_67, %c0_68, %c0_69] : memref<2x1x64xf32, #tpu.memory_space<vmem>>, vector<1x1x64xf32>
    %102 = vector.shape_cast %101 : vector<1x1x64xf32> to vector<1x64xf32>
    %c1_70 = arith.constant 1 : index
    %c0_71 = arith.constant 0 : index
    %c0_72 = arith.constant 0 : index
    %103 = vector.load %arg7[%c1_70, %c0_71, %c0_72] : memref<2x1x64xf32, #tpu.memory_space<vmem>>, vector<1x1x64xf32>
    %104 = vector.shape_cast %103 : vector<1x1x64xf32> to vector<1x64xf32>
    %cst_73 = arith.constant dense<0.000000e+00> : vector<64x64xf32>
    %105 = tpu.matmul %96, %98, %cst_73 {dimension_numbers = #tpu.dot_dimension_numbers<[1], [0], [0], [1], [0, 0, 1, 1], [], []>} : vector<64x32xbf16>, vector<32x64xbf16>, vector<64x64xf32> -> vector<64x64xf32>
    %106 = vector.broadcast %100 : vector<1x64xf32> to vector<64x64xf32>
    %107 = arith.addf %105, %106 : vector<64x64xf32>
    %cst_74 = arith.constant dense<0.000000e+00> : vector<64xf32>
    %108 = vector.multi_reduction <add>, %107, %cst_74 [1] : vector<64x64xf32> to vector<64xf32>
    %109 = vector.shape_cast %108 : vector<64xf32> to vector<64x1xf32>
    %cst_75 = arith.constant 1.562500e-02 : f32
    %110 = vector.broadcast %cst_75 : f32 to vector<64x1xf32>
    %111 = arith.mulf %109, %110 : vector<64x1xf32>
    %112 = vector.broadcast %111 : vector<64x1xf32> to vector<64x64xf32>
    %113 = arith.subf %107, %112 : vector<64x64xf32>
    %114 = arith.mulf %113, %113 : vector<64x64xf32>
    %cst_76 = arith.constant dense<0.000000e+00> : vector<64xf32>
    %115 = vector.multi_reduction <add>, %114, %cst_76 [1] : vector<64x64xf32> to vector<64xf32>
    %116 = vector.shape_cast %115 : vector<64xf32> to vector<64x1xf32>
    %cst_77 = arith.constant 1.562500e-02 : f32
    %117 = vector.broadcast %cst_77 : f32 to vector<64x1xf32>
    %118 = arith.mulf %116, %117 : vector<64x1xf32>
    %cst_78 = arith.constant 9.99999974E-6 : f32
    %119 = vector.broadcast %cst_78 : f32 to vector<64x1xf32>
    %120 = arith.addf %118, %119 : vector<64x1xf32>
    %121 = math.rsqrt %120 : vector<64x1xf32>
    %122 = vector.broadcast %121 : vector<64x1xf32> to vector<64x64xf32>
    %123 = arith.mulf %113, %122 : vector<64x64xf32>
    %124 = vector.broadcast %102 : vector<1x64xf32> to vector<64x64xf32>
    %125 = arith.mulf %123, %124 : vector<64x64xf32>
    %126 = vector.broadcast %104 : vector<1x64xf32> to vector<64x64xf32>
    %127 = arith.addf %125, %126 : vector<64x64xf32>
    %c1_79 = arith.constant 1 : index
    %c0_80 = arith.constant 0 : index
    %c0_81 = arith.constant 0 : index
    %128 = vector.load %arg3[%c1_79, %c0_80, %c0_81] : memref<2x96x32xbf16, #tpu.memory_space<vmem>>, vector<1x96x32xbf16>
    %129 = vector.shape_cast %128 : vector<1x96x32xbf16> to vector<96x32xbf16>
    %c1_82 = arith.constant 1 : index
    %c0_83 = arith.constant 0 : index
    %c0_84 = arith.constant 0 : index
    %130 = vector.load %arg8[%c1_82, %c0_83, %c0_84] : memref<2x32x64xbf16, #tpu.memory_space<vmem>>, vector<1x32x64xbf16>
    %131 = vector.shape_cast %130 : vector<1x32x64xbf16> to vector<32x64xbf16>
    %c1_85 = arith.constant 1 : index
    %c0_86 = arith.constant 0 : index
    %c0_87 = arith.constant 0 : index
    %132 = vector.load %arg9[%c1_85, %c0_86, %c0_87] : memref<2x1x64xf32, #tpu.memory_space<vmem>>, vector<1x1x64xf32>
    %133 = vector.shape_cast %132 : vector<1x1x64xf32> to vector<1x64xf32>
    %c1_88 = arith.constant 1 : index
    %c0_89 = arith.constant 0 : index
    %c0_90 = arith.constant 0 : index
    %134 = vector.load %arg10[%c1_88, %c0_89, %c0_90] : memref<2x1x64xf32, #tpu.memory_space<vmem>>, vector<1x1x64xf32>
    %135 = vector.shape_cast %134 : vector<1x1x64xf32> to vector<1x64xf32>
    %c1_91 = arith.constant 1 : index
    %c0_92 = arith.constant 0 : index
    %c0_93 = arith.constant 0 : index
    %136 = vector.load %arg11[%c1_91, %c0_92, %c0_93] : memref<2x1x64xf32, #tpu.memory_space<vmem>>, vector<1x1x64xf32>
    %137 = vector.shape_cast %136 : vector<1x1x64xf32> to vector<1x64xf32>
    %cst_94 = arith.constant dense<0.000000e+00> : vector<96x64xf32>
    %138 = tpu.matmul %129, %131, %cst_94 {dimension_numbers = #tpu.dot_dimension_numbers<[1], [0], [0], [1], [0, 0, 1, 1], [], []>} : vector<96x32xbf16>, vector<32x64xbf16>, vector<96x64xf32> -> vector<96x64xf32>
    %139 = vector.broadcast %133 : vector<1x64xf32> to vector<96x64xf32>
    %140 = arith.addf %138, %139 : vector<96x64xf32>
    %cst_95 = arith.constant dense<0.000000e+00> : vector<96xf32>
    %141 = vector.multi_reduction <add>, %140, %cst_95 [1] : vector<96x64xf32> to vector<96xf32>
    %142 = vector.shape_cast %141 : vector<96xf32> to vector<96x1xf32>
    %cst_96 = arith.constant 1.562500e-02 : f32
    %143 = vector.broadcast %cst_96 : f32 to vector<96x1xf32>
    %144 = arith.mulf %142, %143 : vector<96x1xf32>
    %145 = vector.broadcast %144 : vector<96x1xf32> to vector<96x64xf32>
    %146 = arith.subf %140, %145 : vector<96x64xf32>
    %147 = arith.mulf %146, %146 : vector<96x64xf32>
    %cst_97 = arith.constant dense<0.000000e+00> : vector<96xf32>
    %148 = vector.multi_reduction <add>, %147, %cst_97 [1] : vector<96x64xf32> to vector<96xf32>
    %149 = vector.shape_cast %148 : vector<96xf32> to vector<96x1xf32>
    %cst_98 = arith.constant 1.562500e-02 : f32
    %150 = vector.broadcast %cst_98 : f32 to vector<96x1xf32>
    %151 = arith.mulf %149, %150 : vector<96x1xf32>
    %cst_99 = arith.constant 9.99999974E-6 : f32
    %152 = vector.broadcast %cst_99 : f32 to vector<96x1xf32>
    %153 = arith.addf %151, %152 : vector<96x1xf32>
    %154 = math.rsqrt %153 : vector<96x1xf32>
    %155 = vector.broadcast %154 : vector<96x1xf32> to vector<96x64xf32>
    %156 = arith.mulf %146, %155 : vector<96x64xf32>
    %157 = vector.broadcast %135 : vector<1x64xf32> to vector<96x64xf32>
    %158 = arith.mulf %156, %157 : vector<96x64xf32>
    %159 = vector.broadcast %137 : vector<1x64xf32> to vector<96x64xf32>
    %160 = arith.addf %158, %159 : vector<96x64xf32>
    %161 = arith.truncf %127 : vector<64x64xf32> to vector<64x64xbf16>
    %162 = arith.truncf %160 : vector<96x64xf32> to vector<96x64xbf16>
    %cst_100 = arith.constant dense<0.000000e+00> : vector<64x96xf32>
    %163 = tpu.matmul %161, %162, %cst_100 {dimension_numbers = #tpu.dot_dimension_numbers<[1], [1], [0], [0], [0, 0, 1, 0], [], []>} : vector<64x64xbf16>, vector<96x64xbf16>, vector<64x96xf32> -> vector<64x96xf32>
    %cst_101 = arith.constant dense<0.000000e+00> : vector<96x64xf32>
    %164 = tpu.matmul %162, %161, %cst_101 {dimension_numbers = #tpu.dot_dimension_numbers<[1], [1], [0], [0], [0, 0, 1, 0], [], []>} : vector<96x64xbf16>, vector<64x64xbf16>, vector<96x64xf32> -> vector<96x64xf32>
    %165 = vector.shape_cast %163 : vector<64x96xf32> to vector<4x16x96xf32>
    %c1_102 = arith.constant 1 : index
    %c0_103 = arith.constant 0 : index
    %c0_104 = arith.constant 0 : index
    %166 = vector.load %arg12[%c1_102, %c0_103, %c0_104] : memref<2x16x96xf32, #tpu.memory_space<vmem>>, vector<1x16x96xf32>
    %167 = vector.shape_cast %166 : vector<1x16x96xf32> to vector<16x96xf32>
    %168 = vector.shape_cast %167 : vector<16x96xf32> to vector<1x16x96xf32>
    %169 = vector.broadcast %168 : vector<1x16x96xf32> to vector<4x16x96xf32>
    %170 = arith.mulf %165, %169 : vector<4x16x96xf32>
    %cst_105 = arith.constant dense<0xFF800000> : vector<4x96xf32>
    %171 = vector.multi_reduction <maximumf>, %170, %cst_105 [1] : vector<4x16x96xf32> to vector<4x96xf32>
    %172 = vector.shape_cast %164 : vector<96x64xf32> to vector<6x16x64xf32>
    %c1_106 = arith.constant 1 : index
    %c0_107 = arith.constant 0 : index
    %c0_108 = arith.constant 0 : index
    %173 = vector.load %arg13[%c1_106, %c0_107, %c0_108] : memref<2x16x64xf32, #tpu.memory_space<vmem>>, vector<1x16x64xf32>
    %174 = vector.shape_cast %173 : vector<1x16x64xf32> to vector<16x64xf32>
    %175 = vector.shape_cast %174 : vector<16x64xf32> to vector<1x16x64xf32>
    %176 = vector.broadcast %175 : vector<1x16x64xf32> to vector<6x16x64xf32>
    %177 = arith.mulf %172, %176 : vector<6x16x64xf32>
    %cst_109 = arith.constant dense<0xFF800000> : vector<6x64xf32>
    %178 = vector.multi_reduction <maximumf>, %177, %cst_109 [1] : vector<6x16x64xf32> to vector<6x64xf32>
    %c1_110 = arith.constant 1 : index
    %c0_111 = arith.constant 0 : index
    %c0_112 = arith.constant 0 : index
    %179 = vector.load %arg14[%c1_110, %c0_111, %c0_112] : memref<2x4x64xbf16, #tpu.memory_space<vmem>>, vector<1x4x64xbf16>
    %180 = vector.shape_cast %179 : vector<1x4x64xbf16> to vector<4x64xbf16>
    %181 = arith.truncf %178 : vector<6x64xf32> to vector<6x64xbf16>
    %cst_113 = arith.constant dense<0.000000e+00> : vector<4x6xf32>
    %182 = tpu.matmul %180, %181, %cst_113 {dimension_numbers = #tpu.dot_dimension_numbers<[1], [1], [0], [0], [0, 0, 1, 0], [], []>} : vector<4x64xbf16>, vector<6x64xbf16>, vector<4x6xf32> -> vector<4x6xf32>
    %183 = arith.truncf %171 : vector<4x96xf32> to vector<4x96xbf16>
    %c1_114 = arith.constant 1 : index
    %c0_115 = arith.constant 0 : index
    %c0_116 = arith.constant 0 : index
    %184 = vector.load %arg15[%c1_114, %c0_115, %c0_116] : memref<2x6x96xbf16, #tpu.memory_space<vmem>>, vector<1x6x96xbf16>
    %185 = vector.shape_cast %184 : vector<1x6x96xbf16> to vector<6x96xbf16>
    %cst_117 = arith.constant dense<0.000000e+00> : vector<4x6xf32>
    %186 = tpu.matmul %183, %185, %cst_117 {dimension_numbers = #tpu.dot_dimension_numbers<[1], [1], [0], [0], [0, 0, 1, 0], [], []>} : vector<4x96xbf16>, vector<6x96xbf16>, vector<4x6xf32> -> vector<4x6xf32>
    %187 = arith.addf %94, %182 : vector<4x6xf32>
    %188 = arith.addf %187, %186 : vector<4x6xf32>
    %c0_118 = arith.constant 0 : index
    %189 = memref.load %arg16[%c0_118] : memref<1xf32, #tpu.memory_space<smem>>
    %190 = vector.broadcast %189 : f32 to vector<4x6xf32>
    %191 = arith.addf %188, %190 : vector<4x6xf32>
    %c0_119 = arith.constant 0 : index
    %c0_120 = arith.constant 0 : index
    %192 = vector.load %arg17[%c0_119, %c0_120] : memref<4x6xf32, #tpu.memory_space<vmem>>, vector<4x6xf32>
    tpu.vector_store %arg17[%c0_119, %c0_120], %191 {strides = array<i32>} : memref<4x6xf32, #tpu.memory_space<vmem>>, vector<4x6xf32>,
    return
  }
  func.func @transform_0(%arg0: i32, %arg1: i32) -> (i32, i32, i32) {
    %c0_i32 = arith.constant 0 : i32
    %c0_i32_0 = arith.constant 0 : i32
    %c0_i32_1 = arith.constant 0 : i32
    return %c0_i32, %arg0, %c0_i32_0 : i32, i32, i32
  }
  func.func @transform_1(%arg0: i32, %arg1: i32) -> (i32, i32, i32) {
    %c0_i32 = arith.constant 0 : i32
    %c0_i32_0 = arith.constant 0 : i32
    %c0_i32_1 = arith.constant 0 : i32
    return %c0_i32, %arg1, %c0_i32_0 : i32, i32, i32
  }
  func.func @transform_2(%arg0: i32, %arg1: i32) -> (i32, i32, i32) {
    %c0_i32 = arith.constant 0 : i32
    %c0_i32_0 = arith.constant 0 : i32
    %c0_i32_1 = arith.constant 0 : i32
    %c0_i32_2 = arith.constant 0 : i32
    return %c0_i32, %c0_i32_0, %c0_i32_1 : i32, i32, i32
  }
  func.func @transform_3(%arg0: i32, %arg1: i32) -> (i32, i32, i32) {
    %c0_i32 = arith.constant 0 : i32
    %c0_i32_0 = arith.constant 0 : i32
    %c0_i32_1 = arith.constant 0 : i32
    %c0_i32_2 = arith.constant 0 : i32
    return %c0_i32, %c0_i32_0, %c0_i32_1 : i32, i32, i32
  }
  func.func @transform_4(%arg0: i32, %arg1: i32) -> (i32, i32, i32) {
    %c0_i32 = arith.constant 0 : i32
    %c0_i32_0 = arith.constant 0 : i32
    %c0_i32_1 = arith.constant 0 : i32
    %c0_i32_2 = arith.constant 0 : i32
    return %c0_i32, %c0_i32_0, %c0_i32_1 : i32, i32, i32
  }
  func.func @transform_5(%arg0: i32, %arg1: i32) -> (i32, i32, i32) {
    %c0_i32 = arith.constant 0 : i32
    %c0_i32_0 = arith.constant 0 : i32
    %c0_i32_1 = arith.constant 0 : i32
    %c0_i32_2 = arith.constant 0 : i32
    return %c0_i32, %c0_i32_0, %c0_i32_1 : i32, i32, i32
  }
  func.func @transform_6(%arg0: i32, %arg1: i32) -> (i32, i32, i32) {
    %c0_i32 = arith.constant 0 : i32
    %c0_i32_0 = arith.constant 0 : i32
    %c0_i32_1 = arith.constant 0 : i32
    %c0_i32_2 = arith.constant 0 : i32
    return %c0_i32, %c0_i32_0, %c0_i32_1 : i32, i32, i32
  }
  func.func @transform_7(%arg0: i32, %arg1: i32) -> (i32, i32, i32) {
    %c0_i32 = arith.constant 0 : i32
    %c0_i32_0 = arith.constant 0 : i32
    %c0_i32_1 = arith.constant 0 : i32
    %c0_i32_2 = arith.constant 0 : i32
    return %c0_i32, %c0_i32_0, %c0_i32_1 : i32, i32, i32
  }
  func.func @transform_8(%arg0: i32, %arg1: i32) -> (i32, i32, i32) {
    %c0_i32 = arith.constant 0 : i32
    %c0_i32_0 = arith.constant 0 : i32
    %c0_i32_1 = arith.constant 0 : i32
    %c0_i32_2 = arith.constant 0 : i32
    return %c0_i32, %c0_i32_0, %c0_i32_1 : i32, i32, i32
  }
  func.func @transform_9(%arg0: i32, %arg1: i32) -> (i32, i32, i32) {
    %c0_i32 = arith.constant 0 : i32
    %c0_i32_0 = arith.constant 0 : i32
    %c0_i32_1 = arith.constant 0 : i32
    %c0_i32_2 = arith.constant 0 : i32
    return %c0_i32, %c0_i32_0, %c0_i32_1 : i32, i32, i32
  }
  func.func @transform_10(%arg0: i32, %arg1: i32) -> (i32, i32, i32) {
    %c0_i32 = arith.constant 0 : i32
    %c0_i32_0 = arith.constant 0 : i32
    %c0_i32_1 = arith.constant 0 : i32
    return %c0_i32, %c0_i32_0, %arg1 : i32, i32, i32
  }
  func.func @transform_11(%arg0: i32, %arg1: i32) -> (i32, i32, i32) {
    %c0_i32 = arith.constant 0 : i32
    %c0_i32_0 = arith.constant 0 : i32
    %c0_i32_1 = arith.constant 0 : i32
    return %c0_i32, %c0_i32_0, %arg0 : i32, i32, i32
  }
  func.func @transform_12(%arg0: i32, %arg1: i32) -> (i32, i32, i32) {
    %c0_i32 = arith.constant 0 : i32
    %c0_i32_0 = arith.constant 0 : i32
    return %c0_i32, %arg0, %arg0 : i32, i32, i32
  }
  func.func @transform_13(%arg0: i32, %arg1: i32) -> (i32, i32, i32) {
    %c0_i32 = arith.constant 0 : i32
    %c0_i32_0 = arith.constant 0 : i32
    return %c0_i32, %arg1, %arg1 : i32, i32, i32
  }
  func.func @transform_14(%arg0: i32, %arg1: i32) -> i32 {
    %c0_i32 = arith.constant 0 : i32
    %c0_i32_0 = arith.constant 0 : i32
    return %c0_i32 : i32
  }
  func.func @transform_15(%arg0: i32, %arg1: i32) -> (i32, i32) {
    %c0_i32 = arith.constant 0 : i32
    return %arg0, %arg1 : i32, i32
  }
}

</mosaic_0001>

<llo_original>
// kernel: tpu_custom_call.1
$region0: #{tpu_custom_call.1}
  #allocation0 [shape = 'u32[]', space=smem, size = 0x4, offset = 0x4, fixed_abs, tag = 'smem constant byte address 0x4 - core index']
  #allocation1 [shape = 'u32[72,128]{1,0:T(1,128)}', space=vmem, size = 0x9000, scoped, tag = 'internal scratch']
  #allocation2 [shape = 'f32[1]{0:T(128)S(6)}', space=smem, size = 0x200, scoped, tag = 'scoped memory for tpu_custom_call.1']
  %s0 = inlined_call_operand.vmem [shape: bf16[2,64,32], index: 0, kind: input, shape index: {}]
  %s1 = inlined_call_operand.vmem [shape: bf16[2,96,32], index: 1, kind: input, shape index: {}]
  %s2 = inlined_call_operand.vmem [shape: bf16[2,32,64], index: 2, kind: input, shape index: {}]
  %s3 = inlined_call_operand.vmem [shape: f32[2,1,64], index: 3, kind: input, shape index: {}]
  %s4 = inlined_call_operand.vmem [shape: f32[2,1,64], index: 4, kind: input, shape index: {}]
  %s5 = inlined_call_operand.vmem [shape: f32[2,1,64], index: 5, kind: input, shape index: {}]
  %s6 = inlined_call_operand.vmem [shape: bf16[2,32,64], index: 6, kind: input, shape index: {}]
  %s7 = inlined_call_operand.vmem [shape: f32[2,1,64], index: 7, kind: input, shape index: {}]
  %s8 = inlined_call_operand.vmem [shape: f32[2,1,64], index: 8, kind: input, shape index: {}]
  %s9 = inlined_call_operand.vmem [shape: f32[2,1,64], index: 9, kind: input, shape index: {}]
  %s10 = inlined_call_operand.vmem [shape: f32[2,16,96], index: 10, kind: input, shape index: {}]
  %s11 = inlined_call_operand.vmem [shape: f32[2,16,64], index: 11, kind: input, shape index: {}]
  %s12 = inlined_call_operand.vmem [shape: bf16[2,4,64], index: 12, kind: input, shape index: {}]
  %s13 = inlined_call_operand.vmem [shape: bf16[2,6,96], index: 13, kind: input, shape index: {}]
  %s14 = inlined_call_operand.<no memory space> [shape: f32[1], index: 14, kind: input, shape index: {}]
  %s15 = inlined_call_operand.hbm [shape: f32[4,6], index: 15, kind: output, shape index: {}]
  %s16 = sld [smem:[#allocation0]]
  $region70: #{tpu_custom_call.1} parent=0
    _
  %s18 = ssub.s32 1, %s16
  %s19 = scalar_select 0, %s18, %s16
  %20 = sst [smem:[#allocation2]] %s14
  $region1: #{tpu_custom_call.1} parent=0
    #allocation3 [shape = 'u8[2048]{0}', space=vmem, size = 0x800, scoped, tag = 'output window, operand 0, single buffered']
    #allocation4 [shape = 's32[1]{0}', space=sflag, size = 0x4, scoped, tag = 'scoped memory for tpu_custom_call.1']
    %21 = vsyncpa [#allocation4], 0
    // Predicated region
    $region2: #{tpu_custom_call.1} parent=1 // pred_check
      _
    $region3: #{tpu_custom_call.1} parent=1 // pred_check_branch
      %23 = sbr.rel (0) target = $region5
    $region4: #{tpu_custom_call.1} parent=1 // pred_region
      _
    $region5: #{tpu_custom_call.1} parent=1 // pred_fallthru
      _
    // Predicated region
    $region6: #{tpu_custom_call.1} parent=1 // pred_check
      _
    $region7: #{tpu_custom_call.1} parent=1 // pred_check_branch
      %25 = sbr.rel (0) target = $region9
    $region8: #{tpu_custom_call.1} parent=1 // pred_region
      _
    $region9: #{tpu_custom_call.1} parent=1 // pred_fallthru
      _
    // Predicated region
    $region10: #{tpu_custom_call.1} parent=1 // pred_check
      _
    $region11: #{tpu_custom_call.1} parent=1 // pred_check_branch
      %27 = sbr.rel (0) target = $region13
    $region12: #{tpu_custom_call.1} parent=1 // pred_region
      _
    $region13: #{tpu_custom_call.1} parent=1 // pred_fallthru
      _
    // Predicated region
    $region14: #{tpu_custom_call.1} parent=1 // pred_check
      _
    $region15: #{tpu_custom_call.1} parent=1 // pred_check_branch
      %29 = sbr.rel (0) target = $region17
    $region16: #{tpu_custom_call.1} parent=1 // pred_region
      _
    $region17: #{tpu_custom_call.1} parent=1 // pred_fallthru
      _
    // Predicated region
    $region18: #{tpu_custom_call.1} parent=1 // pred_check
      _
    $region19: #{tpu_custom_call.1} parent=1 // pred_check_branch
      %31 = sbr.rel (0) target = $region21
    $region20: #{tpu_custom_call.1} parent=1 // pred_region
      _
    $region21: #{tpu_custom_call.1} parent=1 // pred_fallthru
      _
    // Predicated region
    $region22: #{tpu_custom_call.1} parent=1 // pred_check
      _
    $region23: #{tpu_custom_call.1} parent=1 // pred_check_branch
      %33 = sbr.rel (0) target = $region25
    $region24: #{tpu_custom_call.1} parent=1 // pred_region
      _
    $region25: #{tpu_custom_call.1} parent=1 // pred_fallthru
      _
    // Predicated region
    $region26: #{tpu_custom_call.1} parent=1 // pred_check
      _
    $region27: #{tpu_custom_call.1} parent=1 // pred_check_branch
      %35 = sbr.rel (0) target = $region29
    $region28: #{tpu_custom_call.1} parent=1 // pred_region
      _
    $region29: #{tpu_custom_call.1} parent=1 // pred_fallthru
      _
    // Predicated region
    $region30: #{tpu_custom_call.1} parent=1 // pred_check
      _
    $region31: #{tpu_custom_call.1} parent=1 // pred_check_branch
      %37 = sbr.rel (0) target = $region33
    $region32: #{tpu_custom_call.1} parent=1 // pred_region
      _
    $region33: #{tpu_custom_call.1} parent=1 // pred_fallthru
      _
    // Predicated region
    $region34: #{tpu_custom_call.1} parent=1 // pred_check
      _
    $region35: #{tpu_custom_call.1} parent=1 // pred_check_branch
      %39 = sbr.rel (0) target = $region37
    $region36: #{tpu_custom_call.1} parent=1 // pred_region
      _
    $region37: #{tpu_custom_call.1} parent=1 // pred_fallthru
      _
    // Predicated region
    $region38: #{tpu_custom_call.1} parent=1 // pred_check
      _
    $region39: #{tpu_custom_call.1} parent=1 // pred_check_branch
      %41 = sbr.rel (0) target = $region41
    $region40: #{tpu_custom_call.1} parent=1 // pred_region
      _
    $region41: #{tpu_custom_call.1} parent=1 // pred_fallthru
      _
    // Predicated region
    $region42: #{tpu_custom_call.1} parent=1 // pred_check
      _
    $region43: #{tpu_custom_call.1} parent=1 // pred_check_branch
      %43 = sbr.rel (0) target = $region45
    $region44: #{tpu_custom_call.1} parent=1 // pred_region
      _
    $region45: #{tpu_custom_call.1} parent=1 // pred_fallthru
      _
    // Predicated region
    $region46: #{tpu_custom_call.1} parent=1 // pred_check
      _
    $region47: #{tpu_custom_call.1} parent=1 // pred_check_branch
      %45 = sbr.rel (0) target = $region49
    $region48: #{tpu_custom_call.1} parent=1 // pred_region
      _
    $region49: #{tpu_custom_call.1} parent=1 // pred_fallthru
      _
    // Predicated region
    $region50: #{tpu_custom_call.1} parent=1 // pred_check
      _
    $region51: #{tpu_custom_call.1} parent=1 // pred_check_branch
      %47 = sbr.rel (0) target = $region53
    $region52: #{tpu_custom_call.1} parent=1 // pred_region
      _
    $region53: #{tpu_custom_call.1} parent=1 // pred_fallthru
      _
    // Predicated region
    $region54: #{tpu_custom_call.1} parent=1 // pred_check
      _
    $region55: #{tpu_custom_call.1} parent=1 // pred_check_branch
      %49 = sbr.rel (0) target = $region57
    $region56: #{tpu_custom_call.1} parent=1 // pred_region
      _
    $region57: #{tpu_custom_call.1} parent=1 // pred_fallthru
      _
    // Predicated region
    $region58: #{tpu_custom_call.1} parent=1 // pred_check
      _
    $region59: #{tpu_custom_call.1} parent=1 // pred_check_branch
      %51 = sbr.rel (0) target = $region61
    $region60: #{tpu_custom_call.1} parent=1 // pred_region
      _
    $region61: #{tpu_custom_call.1} parent=1 // pred_fallthru
      _
    %v53 = vld [vmem:[%s0] sm:$0xf]
    %v54 = vld [vmem:[%s0 + $0x4] sm:$0xf]
    %v55 = vld [vmem:[%s0 + $0x8] sm:$0xf]
    %v56 = vld [vmem:[%s0 + $0xc] sm:$0xf]
    %v57 = vld [vmem:[%s0 + $0x10] sm:$0xf]
    %v58 = vld [vmem:[%s0 + $0x14] sm:$0xf]
    %v59 = vld [vmem:[%s0 + $0x18] sm:$0xf]
    %v60 = vld [vmem:[%s0 + $0x1c] sm:$0xf]
    %v61 = vld [vmem:[%s2] sm:$0xf]
    %v62 = vld [vmem:[%s2 + $0x4] sm:$0xf]
    %v63 = vld [vmem:[%s2 + $0x8] sm:$0xf]
    %v64 = vld [vmem:[%s2 + $0xc] sm:$0xf]
    %v65 = vld [vmem:[%s3] sm:$0x1]
    %v66 = vld [vmem:[%s4] sm:$0x1]
    %v67 = vld [vmem:[%s5] sm:$0x1]
    %v69 = vperm.slane %v65, 0
    %v79 = vunpack.c.l.b16 %v53
    %v80 = vunpack.c.l.b16 %v54
    %v81 = vunpack.c.l.b16 %v55
    %v82 = vunpack.c.l.b16 %v56
    %v83 = vunpack.c.l.b16 %v57
    %v84 = vunpack.c.l.b16 %v58
    %v85 = vunpack.c.l.b16 %v59
    %v86 = vunpack.c.l.b16 %v60
    %v87 = vpack.c.b16 %v80, %v79
    %v88 = vpack.c.b16 %v82, %v81
    %v89 = vpack.c.b16 %v84, %v83
    %v90 = vpack.c.b16 %v86, %v85
    %v95 = vunpack.c.l.b16 %v61
    %v96 = vunpack.c.l.b16 %v62
    %v97 = vunpack.c.l.b16 %v63
    %v98 = vunpack.c.l.b16 %v64
    %v99 = vpack.c.b16 %v96, %v95
    %v100 = vpack.c.b16 %v98, %v97
    %vm103 = vcmask 261120
    %v105 = vsel %vm103, %v87, 0
    %v108 = vsel %vm103, %v88, 0
    %v111 = vsel %vm103, %v89, 0
    %v114 = vsel %vm103, %v90, 0
    %116 = vmatpush.bf16.msra.mxu0 0
    %117 = vmatpush.bf16.msra.mxu0 0
    %118 = vmatpush.bf16.msra.mxu0 0
    %119 = vmatpush.bf16.msra.mxu0 0
    %120 = vmatpush.bf16.msra.mxu0 0
    %121 = vmatpush.bf16.msra.mxu0 0
    %122 = vmatpush.bf16.msra.mxu0 %v100
    %123 = vmatpush.bf16.msra.mxu0 %v99
    %124 = vmatmul.bf16.gmra.mxu0 %v105
    %v125 = vpop.f32.mrf.mxu0
    %v126 = vadd.f32 %v69, %v125
    %v127 = vpop.f32.mrf.mxu0
    %v128 = vadd.f32 %v69, %v127
    %129 = vmatmul.bf16.gmra.mxu0 %v108
    %v130 = vpop.f32.mrf.mxu0
    %v131 = vadd.f32 %v69, %v130
    %v132 = vpop.f32.mrf.mxu0
    %v133 = vadd.f32 %v69, %v132
    %134 = vmatmul.bf16.gmra.mxu0 %v111
    %v135 = vpop.f32.mrf.mxu0
    %v136 = vadd.f32 %v69, %v135
    %v137 = vpop.f32.mrf.mxu0
    %v138 = vadd.f32 %v69, %v137
    %139 = vmatmul.bf16.gmra.mxu0 %v114
    %v140 = vpop.f32.mrf.mxu0
    %v141 = vadd.f32 %v69, %v140
    %v142 = vpop.f32.mrf.mxu0
    %v143 = vadd.f32 %v69, %v142
    %144 = vdwg.mxu0
    %vm145 = vcmask 523264
    %v146 = vsel %vm145, %v126, 0.0
    %147 = vadd.xlane.f32.xlu0 %v146
    %v148 = vpop.xlane.xlu0 %147
    %v149 = vsel %vm145, %v128, 0.0
    %150 = vadd.xlane.f32.xlu0 %v149
    %v151 = vpop.xlane.xlu0 %150
    %v152 = vsel %vm145, %v131, 0.0
    %153 = vadd.xlane.f32.xlu0 %v152
    %v154 = vpop.xlane.xlu0 %153
    %v155 = vsel %vm145, %v133, 0.0
    %156 = vadd.xlane.f32.xlu0 %v155
    %v157 = vpop.xlane.xlu0 %156
    %v158 = vsel %vm145, %v136, 0.0
    %159 = vadd.xlane.f32.xlu0 %v158
    %v160 = vpop.xlane.xlu0 %159
    %v161 = vsel %vm145, %v138, 0.0
    %162 = vadd.xlane.f32.xlu0 %v161
    %v163 = vpop.xlane.xlu0 %162
    %v164 = vsel %vm145, %v141, 0.0
    %165 = vadd.xlane.f32.xlu0 %v164
    %v166 = vpop.xlane.xlu0 %165
    %v167 = vsel %vm145, %v143, 0.0
    %168 = vadd.xlane.f32.xlu0 %v167
    %v169 = vpop.xlane.xlu0 %168
    %v170 = vmul.f32 %v148, 0.015625
    %v171 = vmul.f32 %v151, 0.015625
    %v172 = vmul.f32 %v154, 0.015625
    %v173 = vmul.f32 %v157, 0.015625
    %v174 = vmul.f32 %v160, 0.015625
    %v175 = vmul.f32 %v163, 0.015625
    %v176 = vmul.f32 %v166, 0.015625
    %v177 = vmul.f32 %v169, 0.015625
    %v178 = vsub.f32 %v126, %v170
    %v179 = vsub.f32 %v128, %v171
    %v180 = vsub.f32 %v131, %v172
    %v181 = vsub.f32 %v133, %v173
    %v182 = vsub.f32 %v136, %v174
    %v183 = vsub.f32 %v138, %v175
    %v184 = vsub.f32 %v141, %v176
    %v185 = vsub.f32 %v143, %v177
    %v186 = vmul.f32 %v178, %v178
    %v187 = vmul.f32 %v179, %v179
    %v188 = vmul.f32 %v180, %v180
    %v189 = vmul.f32 %v181, %v181
    %v190 = vmul.f32 %v182, %v182
    %v191 = vmul.f32 %v183, %v183
    %v192 = vmul.f32 %v184, %v184
    %v193 = vmul.f32 %v185, %v185
    %v194 = vsel %vm145, %v186, 0.0
    %195 = vadd.xlane.f32.xlu0 %v194
    %v196 = vpop.xlane.xlu0 %195
    %v197 = vsel %vm145, %v187, 0.0
    %198 = vadd.xlane.f32.xlu0 %v197
    %v199 = vpop.xlane.xlu0 %198
    %v200 = vsel %vm145, %v188, 0.0
    %201 = vadd.xlane.f32.xlu0 %v200
    %v202 = vpop.xlane.xlu0 %201
    %v203 = vsel %vm145, %v189, 0.0
    %204 = vadd.xlane.f32.xlu0 %v203
    %v205 = vpop.xlane.xlu0 %204
    %v206 = vsel %vm145, %v190, 0.0
    %207 = vadd.xlane.f32.xlu0 %v206
    %v208 = vpop.xlane.xlu0 %207
    %v209 = vsel %vm145, %v191, 0.0
    %210 = vadd.xlane.f32.xlu0 %v209
    %v211 = vpop.xlane.xlu0 %210
    %v212 = vsel %vm145, %v192, 0.0
    %213 = vadd.xlane.f32.xlu0 %v212
    %v214 = vpop.xlane.xlu0 %213
    %v215 = vsel %vm145, %v193, 0.0
    %216 = vadd.xlane.f32.xlu0 %v215
    %v217 = vpop.xlane.xlu0 %216
    %v218 = vmul.f32 %v196, 0.015625
    %v219 = vmul.f32 %v199, 0.015625
    %v220 = vmul.f32 %v202, 0.015625
    %v221 = vmul.f32 %v205, 0.015625
    %v222 = vmul.f32 %v208, 0.015625
    %v223 = vmul.f32 %v211, 0.015625
    %v224 = vmul.f32 %v214, 0.015625
    %v225 = vmul.f32 %v217, 0.015625
    %v226 = vadd.f32 %v218, 1e-05
    %v227 = vadd.f32 %v219, 1e-05
    %v228 = vadd.f32 %v220, 1e-05
    %v229 = vadd.f32 %v221, 1e-05
    %v230 = vadd.f32 %v222, 1e-05
    %v231 = vadd.f32 %v223, 1e-05
    %v232 = vadd.f32 %v224, 1e-05
    %v233 = vadd.f32 %v225, 1e-05
    %v234 = vrsqrt.pop %v226
    %v235 = vmul.f32 %v234, %v226
    %v236 = vmul.f32 %v235, %v234
    %v237 = vmul.f32 0.5, %v236
    %v238 = vsub.f32 1.5, %v237
    %v239 = vmul.f32 %v234, %v238
    %vm240 = vweird.f32 %v226
    %vm241 = vweird.f32 %v234
    %vm242 = vmor %vm240, %vm241
    %v243 = vsel %vm242, %v234, %v239
    %v244 = vrsqrt.pop %v227
    %v245 = vmul.f32 %v244, %v227
    %v246 = vmul.f32 %v245, %v244
    %v247 = vmul.f32 0.5, %v246
    %v248 = vsub.f32 1.5, %v247
    %v249 = vmul.f32 %v244, %v248
    %vm250 = vweird.f32 %v227
    %vm251 = vweird.f32 %v244
    %vm252 = vmor %vm250, %vm251
    %v253 = vsel %vm252, %v244, %v249
    %v254 = vrsqrt.pop %v228
    %v255 = vmul.f32 %v254, %v228
    %v256 = vmul.f32 %v255, %v254
    %v257 = vmul.f32 0.5, %v256
    %v258 = vsub.f32 1.5, %v257
    %v259 = vmul.f32 %v254, %v258
    %vm260 = vweird.f32 %v228
    %vm261 = vweird.f32 %v254
    %vm262 = vmor %vm260, %vm261
    %v263 = vsel %vm262, %v254, %v259
    %v264 = vrsqrt.pop %v229
    %v265 = vmul.f32 %v264, %v229
    %v266 = vmul.f32 %v265, %v264
    %v267 = vmul.f32 0.5, %v266
    %v268 = vsub.f32 1.5, %v267
    %v269 = vmul.f32 %v264, %v268
    %vm270 = vweird.f32 %v229
    %vm271 = vweird.f32 %v264
    %vm272 = vmor %vm270, %vm271
    %v273 = vsel %vm272, %v264, %v269
    %v274 = vrsqrt.pop %v230
    %v275 = vmul.f32 %v274, %v230
    %v276 = vmul.f32 %v275, %v274
    %v277 = vmul.f32 0.5, %v276
    %v278 = vsub.f32 1.5, %v277
    %v279 = vmul.f32 %v274, %v278
    %vm280 = vweird.f32 %v230
    %vm281 = vweird.f32 %v274
    %vm282 = vmor %vm280, %vm281
    %v283 = vsel %vm282, %v274, %v279
    %v284 = vrsqrt.pop %v231
    %v285 = vmul.f32 %v284, %v231
    %v286 = vmul.f32 %v285, %v284
    %v287 = vmul.f32 0.5, %v286
    %v288 = vsub.f32 1.5, %v287
    %v289 = vmul.f32 %v284, %v288
    %vm290 = vweird.f32 %v231
    %vm291 = vweird.f32 %v284
    %vm292 = vmor %vm290, %vm291
    %v293 = vsel %vm292, %v284, %v289
    %v294 = vrsqrt.pop %v232
    %v295 = vmul.f32 %v294, %v232
    %v296 = vmul.f32 %v295, %v294
    %v297 = vmul.f32 0.5, %v296
    %v298 = vsub.f32 1.5, %v297
    %v299 = vmul.f32 %v294, %v298
    %vm300 = vweird.f32 %v232
    %vm301 = vweird.f32 %v294
    %vm302 = vmor %vm300, %vm301
    %v303 = vsel %vm302, %v294, %v299
    %v304 = vrsqrt.pop %v233
    %v305 = vmul.f32 %v304, %v233
    %v306 = vmul.f32 %v305, %v304
    %v307 = vmul.f32 0.5, %v306
    %v308 = vsub.f32 1.5, %v307
    %v309 = vmul.f32 %v304, %v308
    %vm310 = vweird.f32 %v233
    %vm311 = vweird.f32 %v304
    %vm312 = vmor %vm310, %vm311
    %v313 = vsel %vm312, %v304, %v309
    %v314 = vmul.f32 %v178, %v243
    %v315 = vmul.f32 %v179, %v253
    %v316 = vmul.f32 %v180, %v263
    %v317 = vmul.f32 %v181, %v273
    %v318 = vmul.f32 %v182, %v283
    %v319 = vmul.f32 %v183, %v293
    %v320 = vmul.f32 %v184, %v303
    %v321 = vmul.f32 %v185, %v313
    %v323 = vperm.slane %v66, 0
    %v325 = vmul.f32 %v314, %v323
    %v326 = vmul.f32 %v315, %v323
    %v327 = vmul.f32 %v316, %v323
    %v328 = vmul.f32 %v317, %v323
    %v329 = vmul.f32 %v318, %v323
    %v330 = vmul.f32 %v319, %v323
    %v331 = vmul.f32 %v320, %v323
    %v332 = vmul.f32 %v321, %v323
    %v334 = vperm.slane %v67, 0
    %v336 = vadd.f32 %v325, %v334
    %v337 = vadd.f32 %v326, %v334
    %v338 = vadd.f32 %v327, %v334
    %v339 = vadd.f32 %v328, %v334
    %v340 = vadd.f32 %v329, %v334
    %v341 = vadd.f32 %v330, %v334
    %v342 = vadd.f32 %v331, %v334
    %v343 = vadd.f32 %v332, %v334
    %v344 = vld [vmem:[%s1] sm:$0xf]
    %v345 = vld [vmem:[%s1 + $0x4] sm:$0xf]
    %v346 = vld [vmem:[%s1 + $0x8] sm:$0xf]
    %v347 = vld [vmem:[%s1 + $0xc] sm:$0xf]
    %v348 = vld [vmem:[%s1 + $0x10] sm:$0xf]
    %v349 = vld [vmem:[%s1 + $0x14] sm:$0xf]
    %v350 = vld [vmem:[%s1 + $0x18] sm:$0xf]
    %v351 = vld [vmem:[%s1 + $0x1c] sm:$0xf]
    %v352 = vld [vmem:[%s1 + $0x20] sm:$0xf]
    %v353 = vld [vmem:[%s1 + $0x24] sm:$0xf]
    %v354 = vld [vmem:[%s1 + $0x28] sm:$0xf]
    %v355 = vld [vmem:[%s1 + $0x2c] sm:$0xf]
    %v356 = vld [vmem:[%s6] sm:$0xf]
    %v357 = vld [vmem:[%s6 + $0x4] sm:$0xf]
    %v358 = vld [vmem:[%s6 + $0x8] sm:$0xf]
    %v359 = vld [vmem:[%s6 + $0xc] sm:$0xf]
    %v360 = vld [vmem:[%s7] sm:$0x1]
    %v361 = vld [vmem:[%s8] sm:$0x1]
    %v362 = vld [vmem:[%s9] sm:$0x1]
    %v364 = vperm.slane %v360, 0
    %v378 = vunpack.c.l.b16 %v344
    %v379 = vunpack.c.l.b16 %v345
    %v380 = vunpack.c.l.b16 %v346
    %v381 = vunpack.c.l.b16 %v347
    %v382 = vunpack.c.l.b16 %v348
    %v383 = vunpack.c.l.b16 %v349
    %v384 = vunpack.c.l.b16 %v350
    %v385 = vunpack.c.l.b16 %v351
    %v386 = vunpack.c.l.b16 %v352
    %v387 = vunpack.c.l.b16 %v353
    %v388 = vunpack.c.l.b16 %v354
    %v389 = vunpack.c.l.b16 %v355
    %v390 = vpack.c.b16 %v379, %v378
    %v391 = vpack.c.b16 %v381, %v380
    %v392 = vpack.c.b16 %v383, %v382
    %v393 = vpack.c.b16 %v385, %v384
    %v394 = vpack.c.b16 %v387, %v386
    %v395 = vpack.c.b16 %v389, %v388
    %v400 = vunpack.c.l.b16 %v356
    %v401 = vunpack.c.l.b16 %v357
    %v402 = vunpack.c.l.b16 %v358
    %v403 = vunpack.c.l.b16 %v359
    %v404 = vpack.c.b16 %v401, %v400
    %v405 = vpack.c.b16 %v403, %v402
    %v409 = vsel %vm103, %v390, 0
    %v412 = vsel %vm103, %v391, 0
    %v415 = vsel %vm103, %v392, 0
    %v418 = vsel %vm103, %v393, 0
    %v421 = vsel %vm103, %v394, 0
    %v424 = vsel %vm103, %v395, 0
    %426 = vmatpush.bf16.msra.mxu0 0
    %427 = vmatpush.bf16.msra.mxu0 0
    %428 = vmatpush.bf16.msra.mxu0 0
    %429 = vmatpush.bf16.msra.mxu0 0
    %430 = vmatpush.bf16.msra.mxu0 0
    %431 = vmatpush.bf16.msra.mxu0 0
    %432 = vmatpush.bf16.msra.mxu0 %v405
    %433 = vmatpush.bf16.msra.mxu0 %v404
    %434 = vmatmul.bf16.gmra.mxu0 %v409
    %v435 = vpop.f32.mrf.mxu0
    %v436 = vadd.f32 %v364, %v435
    %v437 = vpop.f32.mrf.mxu0
    %v438 = vadd.f32 %v364, %v437
    %439 = vmatmul.bf16.gmra.mxu0 %v412
    %v440 = vpop.f32.mrf.mxu0
    %v441 = vadd.f32 %v364, %v440
    %v442 = vpop.f32.mrf.mxu0
    %v443 = vadd.f32 %v364, %v442
    %444 = vmatmul.bf16.gmra.mxu0 %v415
    %v445 = vpop.f32.mrf.mxu0
    %v446 = vadd.f32 %v364, %v445
    %v447 = vpop.f32.mrf.mxu0
    %v448 = vadd.f32 %v364, %v447
    %449 = vmatmul.bf16.gmra.mxu0 %v418
    %v450 = vpop.f32.mrf.mxu0
    %v451 = vadd.f32 %v364, %v450
    %v452 = vpop.f32.mrf.mxu0
    %v453 = vadd.f32 %v364, %v452
    %454 = vmatmul.bf16.gmra.mxu0 %v421
    %v455 = vpop.f32.mrf.mxu0
    %v456 = vadd.f32 %v364, %v455
    %v457 = vpop.f32.mrf.mxu0
    %v458 = vadd.f32 %v364, %v457
    %459 = vmatmul.bf16.gmra.mxu0 %v424
    %v460 = vpop.f32.mrf.mxu0
    %v461 = vadd.f32 %v364, %v460
    %v462 = vpop.f32.mrf.mxu0
    %v463 = vadd.f32 %v364, %v462
    %464 = vdwg.mxu0
    %v465 = vsel %vm145, %v436, 0.0
    %466 = vadd.xlane.f32.xlu0 %v465
    %v467 = vpop.xlane.xlu0 %466
    %v468 = vsel %vm145, %v438, 0.0
    %469 = vadd.xlane.f32.xlu0 %v468
    %v470 = vpop.xlane.xlu0 %469
    %v471 = vsel %vm145, %v441, 0.0
    %472 = vadd.xlane.f32.xlu0 %v471
    %v473 = vpop.xlane.xlu0 %472
    %v474 = vsel %vm145, %v443, 0.0
    %475 = vadd.xlane.f32.xlu0 %v474
    %v476 = vpop.xlane.xlu0 %475
    %v477 = vsel %vm145, %v446, 0.0
    %478 = vadd.xlane.f32.xlu0 %v477
    %v479 = vpop.xlane.xlu0 %478
    %v480 = vsel %vm145, %v448, 0.0
    %481 = vadd.xlane.f32.xlu0 %v480
    %v482 = vpop.xlane.xlu0 %481
    %v483 = vsel %vm145, %v451, 0.0
    %484 = vadd.xlane.f32.xlu0 %v483
    %v485 = vpop.xlane.xlu0 %484
    %v486 = vsel %vm145, %v453, 0.0
    %487 = vadd.xlane.f32.xlu0 %v486
    %v488 = vpop.xlane.xlu0 %487
    %v489 = vsel %vm145, %v456, 0.0
    %490 = vadd.xlane.f32.xlu0 %v489
    %v491 = vpop.xlane.xlu0 %490
    %v492 = vsel %vm145, %v458, 0.0
    %493 = vadd.xlane.f32.xlu0 %v492
    %v494 = vpop.xlane.xlu0 %493
    %v495 = vsel %vm145, %v461, 0.0
    %496 = vadd.xlane.f32.xlu0 %v495
    %v497 = vpop.xlane.xlu0 %496
    %v498 = vsel %vm145, %v463, 0.0
    %499 = vadd.xlane.f32.xlu0 %v498
    %v500 = vpop.xlane.xlu0 %499
    %v501 = vmul.f32 %v467, 0.015625
    %v502 = vmul.f32 %v470, 0.015625
    %v503 = vmul.f32 %v473, 0.015625
    %v504 = vmul.f32 %v476, 0.015625
    %v505 = vmul.f32 %v479, 0.015625
    %v506 = vmul.f32 %v482, 0.015625
    %v507 = vmul.f32 %v485, 0.015625
    %v508 = vmul.f32 %v488, 0.015625
    %v509 = vmul.f32 %v491, 0.015625
    %v510 = vmul.f32 %v494, 0.015625
    %v511 = vmul.f32 %v497, 0.015625
    %v512 = vmul.f32 %v500, 0.015625
    %v513 = vsub.f32 %v436, %v501
    %v514 = vsub.f32 %v438, %v502
    %v515 = vsub.f32 %v441, %v503
    %v516 = vsub.f32 %v443, %v504
    %v517 = vsub.f32 %v446, %v505
    %v518 = vsub.f32 %v448, %v506
    %v519 = vsub.f32 %v451, %v507
    %v520 = vsub.f32 %v453, %v508
    %v521 = vsub.f32 %v456, %v509
    %v522 = vsub.f32 %v458, %v510
    %v523 = vsub.f32 %v461, %v511
    %v524 = vsub.f32 %v463, %v512
    %v525 = vmul.f32 %v513, %v513
    %v526 = vmul.f32 %v514, %v514
    %v527 = vmul.f32 %v515, %v515
    %v528 = vmul.f32 %v516, %v516
    %v529 = vmul.f32 %v517, %v517
    %v530 = vmul.f32 %v518, %v518
    %v531 = vmul.f32 %v519, %v519
    %v532 = vmul.f32 %v520, %v520
    %v533 = vmul.f32 %v521, %v521
    %v534 = vmul.f32 %v522, %v522
    %v535 = vmul.f32 %v523, %v523
    %v536 = vmul.f32 %v524, %v524
    %v537 = vsel %vm145, %v525, 0.0
    %538 = vadd.xlane.f32.xlu0 %v537
    %v539 = vpop.xlane.xlu0 %538
    %v540 = vsel %vm145, %v526, 0.0
    %541 = vadd.xlane.f32.xlu0 %v540
    %v542 = vpop.xlane.xlu0 %541
    %v543 = vsel %vm145, %v527, 0.0
    %544 = vadd.xlane.f32.xlu0 %v543
    %v545 = vpop.xlane.xlu0 %544
    %v546 = vsel %vm145, %v528, 0.0
    %547 = vadd.xlane.f32.xlu0 %v546
    %v548 = vpop.xlane.xlu0 %547
    %v549 = vsel %vm145, %v529, 0.0
    %550 = vadd.xlane.f32.xlu0 %v549
    %v551 = vpop.xlane.xlu0 %550
    %v552 = vsel %vm145, %v530, 0.0
    %553 = vadd.xlane.f32.xlu0 %v552
    %v554 = vpop.xlane.xlu0 %553
    %v555 = vsel %vm145, %v531, 0.0
    %556 = vadd.xlane.f32.xlu0 %v555
    %v557 = vpop.xlane.xlu0 %556
    %v558 = vsel %vm145, %v532, 0.0
    %559 = vadd.xlane.f32.xlu0 %v558
    %v560 = vpop.xlane.xlu0 %559
    %v561 = vsel %vm145, %v533, 0.0
    %562 = vadd.xlane.f32.xlu0 %v561
    %v563 = vpop.xlane.xlu0 %562
    %v564 = vsel %vm145, %v534, 0.0
    %565 = vadd.xlane.f32.xlu0 %v564
    %v566 = vpop.xlane.xlu0 %565
    %v567 = vsel %vm145, %v535, 0.0
    %568 = vadd.xlane.f32.xlu0 %v567
    %v569 = vpop.xlane.xlu0 %568
    %v570 = vsel %vm145, %v536, 0.0
    %571 = vadd.xlane.f32.xlu0 %v570
    %v572 = vpop.xlane.xlu0 %571
    %v573 = vmul.f32 %v539, 0.015625
    %v574 = vmul.f32 %v542, 0.015625
    %v575 = vmul.f32 %v545, 0.015625
    %v576 = vmul.f32 %v548, 0.015625
    %v577 = vmul.f32 %v551, 0.015625
    %v578 = vmul.f32 %v554, 0.015625
    %v579 = vmul.f32 %v557, 0.015625
    %v580 = vmul.f32 %v560, 0.015625
    %v581 = vmul.f32 %v563, 0.015625
    %v582 = vmul.f32 %v566, 0.015625
    %v583 = vmul.f32 %v569, 0.015625
    %v584 = vmul.f32 %v572, 0.015625
    %v585 = vadd.f32 %v573, 1e-05
    %v586 = vadd.f32 %v574, 1e-05
    %v587 = vadd.f32 %v575, 1e-05
    %v588 = vadd.f32 %v576, 1e-05
    %v589 = vadd.f32 %v577, 1e-05
    %v590 = vadd.f32 %v578, 1e-05
    %v591 = vadd.f32 %v579, 1e-05
    %v592 = vadd.f32 %v580, 1e-05
    %v593 = vadd.f32 %v581, 1e-05
    %v594 = vadd.f32 %v582, 1e-05
    %v595 = vadd.f32 %v583, 1e-05
    %v596 = vadd.f32 %v584, 1e-05
    %v597 = vrsqrt.pop %v585
    %v598 = vmul.f32 %v597, %v585
    %v599 = vmul.f32 %v598, %v597
    %v600 = vmul.f32 0.5, %v599
    %v601 = vsub.f32 1.5, %v600
    %v602 = vmul.f32 %v597, %v601
    %vm603 = vweird.f32 %v585
    %vm604 = vweird.f32 %v597
    %vm605 = vmor %vm603, %vm604
    %v606 = vsel %vm605, %v597, %v602
    %v607 = vrsqrt.pop %v586
    %v608 = vmul.f32 %v607, %v586
    %v609 = vmul.f32 %v608, %v607
    %v610 = vmul.f32 0.5, %v609
    %v611 = vsub.f32 1.5, %v610
    %v612 = vmul.f32 %v607, %v611
    %vm613 = vweird.f32 %v586
    %vm614 = vweird.f32 %v607
    %vm615 = vmor %vm613, %vm614
    %v616 = vsel %vm615, %v607, %v612
    %v617 = vrsqrt.pop %v587
    %v618 = vmul.f32 %v617, %v587
    %v619 = vmul.f32 %v618, %v617
    %v620 = vmul.f32 0.5, %v619
    %v621 = vsub.f32 1.5, %v620
    %v622 = vmul.f32 %v617, %v621
    %vm623 = vweird.f32 %v587
    %vm624 = vweird.f32 %v617
    %vm625 = vmor %vm623, %vm624
    %v626 = vsel %vm625, %v617, %v622
    %v627 = vrsqrt.pop %v588
    %v628 = vmul.f32 %v627, %v588
    %v629 = vmul.f32 %v628, %v627
    %v630 = vmul.f32 0.5, %v629
    %v631 = vsub.f32 1.5, %v630
    %v632 = vmul.f32 %v627, %v631
    %vm633 = vweird.f32 %v588
    %vm634 = vweird.f32 %v627
    %vm635 = vmor %vm633, %vm634
    %v636 = vsel %vm635, %v627, %v632
    %v637 = vrsqrt.pop %v589
    %v638 = vmul.f32 %v637, %v589
    %v639 = vmul.f32 %v638, %v637
    %v640 = vmul.f32 0.5, %v639
    %v641 = vsub.f32 1.5, %v640
    %v642 = vmul.f32 %v637, %v641
    %vm643 = vweird.f32 %v589
    %vm644 = vweird.f32 %v637
    %vm645 = vmor %vm643, %vm644
    %v646 = vsel %vm645, %v637, %v642
    %v647 = vrsqrt.pop %v590
    %v648 = vmul.f32 %v647, %v590
    %v649 = vmul.f32 %v648, %v647
    %v650 = vmul.f32 0.5, %v649
    %v651 = vsub.f32 1.5, %v650
    %v652 = vmul.f32 %v647, %v651
    %vm653 = vweird.f32 %v590
    %vm654 = vweird.f32 %v647
    %vm655 = vmor %vm653, %vm654
    %v656 = vsel %vm655, %v647, %v652
    %v657 = vrsqrt.pop %v591
    %v658 = vmul.f32 %v657, %v591
    %v659 = vmul.f32 %v658, %v657
    %v660 = vmul.f32 0.5, %v659
    %v661 = vsub.f32 1.5, %v660
    %v662 = vmul.f32 %v657, %v661
    %vm663 = vweird.f32 %v591
    %vm664 = vweird.f32 %v657
    %vm665 = vmor %vm663, %vm664
    %v666 = vsel %vm665, %v657, %v662
    %v667 = vrsqrt.pop %v592
    %v668 = vmul.f32 %v667, %v592
    %v669 = vmul.f32 %v668, %v667
    %v670 = vmul.f32 0.5, %v669
    %v671 = vsub.f32 1.5, %v670
    %v672 = vmul.f32 %v667, %v671
    %vm673 = vweird.f32 %v592
    %vm674 = vweird.f32 %v667
    %vm675 = vmor %vm673, %vm674
    %v676 = vsel %vm675, %v667, %v672
    %v677 = vrsqrt.pop %v593
    %v678 = vmul.f32 %v677, %v593
    %v679 = vmul.f32 %v678, %v677
    %v680 = vmul.f32 0.5, %v679
    %v681 = vsub.f32 1.5, %v680
    %v682 = vmul.f32 %v677, %v681
    %vm683 = vweird.f32 %v593
    %vm684 = vweird.f32 %v677
    %vm685 = vmor %vm683, %vm684
    %v686 = vsel %vm685, %v677, %v682
    %v687 = vrsqrt.pop %v594
    %v688 = vmul.f32 %v687, %v594
    %v689 = vmul.f32 %v688, %v687
    %v690 = vmul.f32 0.5, %v689
    %v691 = vsub.f32 1.5, %v690
    %v692 = vmul.f32 %v687, %v691
    %vm693 = vweird.f32 %v594
    %vm694 = vweird.f32 %v687
    %vm695 = vmor %vm693, %vm694
    %v696 = vsel %vm695, %v687, %v692
    %v697 = vrsqrt.pop %v595
    %v698 = vmul.f32 %v697, %v595
    %v699 = vmul.f32 %v698, %v697
    %v700 = vmul.f32 0.5, %v699
    %v701 = vsub.f32 1.5, %v700
    %v702 = vmul.f32 %v697, %v701
    %vm703 = vweird.f32 %v595
    %vm704 = vweird.f32 %v697
    %vm705 = vmor %vm703, %vm704
    %v706 = vsel %vm705, %v697, %v702
    %v707 = vrsqrt.pop %v596
    %v708 = vmul.f32 %v707, %v596
    %v709 = vmul.f32 %v708, %v707
    %v710 = vmul.f32 0.5, %v709
    %v711 = vsub.f32 1.5, %v710
    %v712 = vmul.f32 %v707, %v711
    %vm713 = vweird.f32 %v596
    %vm714 = vweird.f32 %v707
    %vm715 = vmor %vm713, %vm714
    %v716 = vsel %vm715, %v707, %v712
    %v717 = vmul.f32 %v513, %v606
    %v718 = vmul.f32 %v514, %v616
    %v719 = vmul.f32 %v515, %v626
    %v720 = vmul.f32 %v516, %v636
    %v721 = vmul.f32 %v517, %v646
    %v722 = vmul.f32 %v518, %v656
    %v723 = vmul.f32 %v519, %v666
    %v724 = vmul.f32 %v520, %v676
    %v725 = vmul.f32 %v521, %v686
    %v726 = vmul.f32 %v522, %v696
    %v727 = vmul.f32 %v523, %v706
    %v728 = vmul.f32 %v524, %v716
    %v730 = vperm.slane %v361, 0
    %v732 = vmul.f32 %v717, %v730
    %v733 = vmul.f32 %v718, %v730
    %v734 = vmul.f32 %v719, %v730
    %v735 = vmul.f32 %v720, %v730
    %v736 = vmul.f32 %v721, %v730
    %v737 = vmul.f32 %v722, %v730
    %v738 = vmul.f32 %v723, %v730
    %v739 = vmul.f32 %v724, %v730
    %v740 = vmul.f32 %v725, %v730
    %v741 = vmul.f32 %v726, %v730
    %v742 = vmul.f32 %v727, %v730
    %v743 = vmul.f32 %v728, %v730
    %v745 = vperm.slane %v362, 0
    %v747 = vadd.f32 %v732, %v745
    %v748 = vadd.f32 %v733, %v745
    %v749 = vadd.f32 %v734, %v745
    %v750 = vadd.f32 %v735, %v745
    %v751 = vadd.f32 %v736, %v745
    %v752 = vadd.f32 %v737, %v745
    %v753 = vadd.f32 %v738, %v745
    %v754 = vadd.f32 %v739, %v745
    %v755 = vadd.f32 %v740, %v745
    %v756 = vadd.f32 %v741, %v745
    %v757 = vadd.f32 %v742, %v745
    %v758 = vadd.f32 %v743, %v745
    %v759 = vpack.c.bf16 %v337, %v336
    %v760 = vpack.c.bf16 %v339, %v338
    %v761 = vpack.c.bf16 %v341, %v340
    %v762 = vpack.c.bf16 %v343, %v342
    %v763 = vpack.c.bf16 %v748, %v747
    %v764 = vpack.c.bf16 %v750, %v749
    %v765 = vpack.c.bf16 %v752, %v751
    %v766 = vpack.c.bf16 %v754, %v753
    %v767 = vpack.c.bf16 %v756, %v755
    %v768 = vpack.c.bf16 %v758, %v757
    %v770 = vsel %vm145, %v759, 0
    %v773 = vsel %vm145, %v760, 0
    %v776 = vsel %vm145, %v761, 0
    %v779 = vsel %vm145, %v762, 0
    %v782 = vsel %vm145, %v763, 0
    %v785 = vsel %vm145, %v764, 0
    %v788 = vsel %vm145, %v765, 0
    %v791 = vsel %vm145, %v766, 0
    %v794 = vsel %vm145, %v767, 0
    %v797 = vsel %vm145, %v768, 0
    %799 = vmatpush.bf16.xpose.msra.mxu0 0
    %800 = vmatpush.bf16.xpose.msra.mxu0 0
    %801 = vmatpush.bf16.xpose.msra.mxu0 %v797
    %802 = vmatpush.bf16.xpose.msra.mxu0 %v794
    %803 = vmatpush.bf16.xpose.msra.mxu0 %v791
    %804 = vmatpush.bf16.xpose.msra.mxu0 %v788
    %805 = vmatpush.bf16.xpose.msra.mxu0 %v785
    %806 = vmatpush.bf16.xpose.msra.mxu0 %v782
    %807 = vmatmul.bf16.gmra.mxu0 %v770
    %v808 = vpop.f32.mrf.mxu0
    %v809 = vadd.f32 0.0, %v808
    %v810 = vpop.f32.mrf.mxu0
    %v811 = vadd.f32 0.0, %v810
    %812 = vmatmul.bf16.gmra.mxu0 %v773
    %v813 = vpop.f32.mrf.mxu0
    %v814 = vadd.f32 0.0, %v813
    %v815 = vpop.f32.mrf.mxu0
    %v816 = vadd.f32 0.0, %v815
    %817 = vmatmul.bf16.gmra.mxu0 %v776
    %v818 = vpop.f32.mrf.mxu0
    %v819 = vadd.f32 0.0, %v818
    %v820 = vpop.f32.mrf.mxu0
    %v821 = vadd.f32 0.0, %v820
    %822 = vmatmul.bf16.gmra.mxu0 %v779
    %v823 = vpop.f32.mrf.mxu0
    %v824 = vadd.f32 0.0, %v823
    %v825 = vpop.f32.mrf.mxu0
    %v826 = vadd.f32 0.0, %v825
    %827 = vdwg.mxu0
    %828 = vmatpush.bf16.xpose.msra.mxu0 0
    %829 = vmatpush.bf16.xpose.msra.mxu0 0
    %830 = vmatpush.bf16.xpose.msra.mxu0 0
    %831 = vmatpush.bf16.xpose.msra.mxu0 0
    %832 = vmatpush.bf16.xpose.msra.mxu0 %v779
    %833 = vmatpush.bf16.xpose.msra.mxu0 %v776
    %834 = vmatpush.bf16.xpose.msra.mxu0 %v773
    %835 = vmatpush.bf16.xpose.msra.mxu0 %v770
    %836 = vmatmul.bf16.gmra.mxu0 %v782
    %v837 = vpop.f32.mrf.mxu0
    %v838 = vadd.f32 0.0, %v837
    %v839 = vpop.f32.mrf.mxu0
    %v840 = vadd.f32 0.0, %v839
    %841 = vmatmul.bf16.gmra.mxu0 %v785
    %v842 = vpop.f32.mrf.mxu0
    %v843 = vadd.f32 0.0, %v842
    %v844 = vpop.f32.mrf.mxu0
    %v845 = vadd.f32 0.0, %v844
    %846 = vmatmul.bf16.gmra.mxu0 %v788
    %v847 = vpop.f32.mrf.mxu0
    %v848 = vadd.f32 0.0, %v847
    %v849 = vpop.f32.mrf.mxu0
    %v850 = vadd.f32 0.0, %v849
    %851 = vmatmul.bf16.gmra.mxu0 %v791
    %v852 = vpop.f32.mrf.mxu0
    %v853 = vadd.f32 0.0, %v852
    %v854 = vpop.f32.mrf.mxu0
    %v855 = vadd.f32 0.0, %v854
    %856 = vmatmul.bf16.gmra.mxu0 %v794
    %v857 = vpop.f32.mrf.mxu0
    %v858 = vadd.f32 0.0, %v857
    %v859 = vpop.f32.mrf.mxu0
    %v860 = vadd.f32 0.0, %v859
    %861 = vmatmul.bf16.gmra.mxu0 %v797
    %v862 = vpop.f32.mrf.mxu0
    %v863 = vadd.f32 0.0, %v862
    %v864 = vpop.f32.mrf.mxu0
    %v865 = vadd.f32 0.0, %v864
    %866 = vdwg.mxu0
    %v867 = vld [vmem:[%s10] sm:$0xff]
    %v868 = vld [vmem:[%s10 + $0x8] sm:$0xff]
    %v869 = vmul.f32 %v809, %v867
    %v870 = vmul.f32 %v811, %v868
    %v871 = vmul.f32 %v814, %v867
    %v872 = vmul.f32 %v816, %v868
    %v873 = vmul.f32 %v819, %v867
    %v874 = vmul.f32 %v821, %v868
    %v875 = vmul.f32 %v824, %v867
    %v876 = vmul.f32 %v826, %v868
    %vm877 = vcmask 785408
    %v878 = vsel %vm877, %v869, -inf
    %v879 = vsel %vm877, %v870, -inf
    %v880 = vmax.f32 %v878, %v879
    %v881 = vrot.slane %v880, 4
    %v882 = vmax.f32 %v880, %v881
    %v883 = vrot.slane %v882, 2
    %v884 = vmax.f32 %v882, %v883
    %v885 = vrot.slane %v884, 1
    %v886 = vmax.f32 %v884, %v885
    %v887 = vsel %vm877, %v871, -inf
    %v888 = vsel %vm877, %v872, -inf
    %v889 = vmax.f32 %v887, %v888
    %v890 = vrot.slane %v889, 4
    %v891 = vmax.f32 %v889, %v890
    %v892 = vrot.slane %v891, 2
    %v893 = vmax.f32 %v891, %v892
    %v894 = vrot.slane %v893, 1
    %v895 = vmax.f32 %v893, %v894
    %v896 = vsel %vm877, %v873, -inf
    %v897 = vsel %vm877, %v874, -inf
    %v898 = vmax.f32 %v896, %v897
    %v899 = vrot.slane %v898, 4
    %v900 = vmax.f32 %v898, %v899
    %v901 = vrot.slane %v900, 2
    %v902 = vmax.f32 %v900, %v901
    %v903 = vrot.slane %v902, 1
    %v904 = vmax.f32 %v902, %v903
    %v905 = vsel %vm877, %v875, -inf
    %v906 = vsel %vm877, %v876, -inf
    %v907 = vmax.f32 %v905, %v906
    %v908 = vrot.slane %v907, 4
    %v909 = vmax.f32 %v907, %v908
    %v910 = vrot.slane %v909, 2
    %v911 = vmax.f32 %v909, %v910
    %v912 = vrot.slane %v911, 1
    %v913 = vmax.f32 %v911, %v912
    %v914 = vld [vmem:[%s11] sm:$0xff]
    %v915 = vld [vmem:[%s11 + $0x8] sm:$0xff]
    %v916 = vmul.f32 %v838, %v914
    %v917 = vmul.f32 %v840, %v915
    %v918 = vmul.f32 %v843, %v914
    %v919 = vmul.f32 %v845, %v915
    %v920 = vmul.f32 %v848, %v914
    %v921 = vmul.f32 %v850, %v915
    %v922 = vmul.f32 %v853, %v914
    %v923 = vmul.f32 %v855, %v915
    %v924 = vmul.f32 %v858, %v914
    %v925 = vmul.f32 %v860, %v915
    %v926 = vmul.f32 %v863, %v914
    %v927 = vmul.f32 %v865, %v915
    %v928 = vsel %vm145, %v916, -inf
    %v929 = vsel %vm145, %v917, -inf
    %v930 = vmax.f32 %v928, %v929
    %v931 = vrot.slane %v930, 4
    %v932 = vmax.f32 %v930, %v931
    %v933 = vrot.slane %v932, 2
    %v934 = vmax.f32 %v932, %v933
    %v935 = vrot.slane %v934, 1
    %v936 = vmax.f32 %v934, %v935
    %v937 = vsel %vm145, %v918, -inf
    %v938 = vsel %vm145, %v919, -inf
    %v939 = vmax.f32 %v937, %v938
    %v940 = vrot.slane %v939, 4
    %v941 = vmax.f32 %v939, %v940
    %v942 = vrot.slane %v941, 2
    %v943 = vmax.f32 %v941, %v942
    %v944 = vrot.slane %v943, 1
    %v945 = vmax.f32 %v943, %v944
    %v946 = vsel %vm145, %v920, -inf
    %v947 = vsel %vm145, %v921, -inf
    %v948 = vmax.f32 %v946, %v947
    %v949 = vrot.slane %v948, 4
    %v950 = vmax.f32 %v948, %v949
    %v951 = vrot.slane %v950, 2
    %v952 = vmax.f32 %v950, %v951
    %v953 = vrot.slane %v952, 1
    %v954 = vmax.f32 %v952, %v953
    %v955 = vsel %vm145, %v922, -inf
    %v956 = vsel %vm145, %v923, -inf
    %v957 = vmax.f32 %v955, %v956
    %v958 = vrot.slane %v957, 4
    %v959 = vmax.f32 %v957, %v958
    %v960 = vrot.slane %v959, 2
    %v961 = vmax.f32 %v959, %v960
    %v962 = vrot.slane %v961, 1
    %v963 = vmax.f32 %v961, %v962
    %v964 = vsel %vm145, %v924, -inf
    %v965 = vsel %vm145, %v925, -inf
    %v966 = vmax.f32 %v964, %v965
    %v967 = vrot.slane %v966, 4
    %v968 = vmax.f32 %v966, %v967
    %v969 = vrot.slane %v968, 2
    %v970 = vmax.f32 %v968, %v969
    %v971 = vrot.slane %v970, 1
    %v972 = vmax.f32 %v970, %v971
    %v973 = vsel %vm145, %v926, -inf
    %v974 = vsel %vm145, %v927, -inf
    %v975 = vmax.f32 %v973, %v974
    %v976 = vrot.slane %v975, 4
    %v977 = vmax.f32 %v975, %v976
    %v978 = vrot.slane %v977, 2
    %v979 = vmax.f32 %v977, %v978
    %v980 = vrot.slane %v979, 1
    %v981 = vmax.f32 %v979, %v980
    %v982 = vld [vmem:[%s12] sm:$0x3]
    %v983 = vpack.c.bf16 %v936, %v936
    %v984 = vpack.c.bf16 %v945, %v945
    %v985 = vpack.c.bf16 %v954, %v954
    %v986 = vpack.c.bf16 %v963, %v963
    %v987 = vpack.c.bf16 %v972, %v972
    %v988 = vpack.c.bf16 %v981, %v981
    %v989 = vpack.c.bf16 %v886, %v886
    %v990 = vpack.c.bf16 %v895, %v895
    %v991 = vpack.c.bf16 %v904, %v904
    %v992 = vpack.c.bf16 %v913, %v913
    %v993 = vld [vmem:[%s13] sm:$0x7]
    %v998 = vunpack.c.l.b16 %v989
    %v999 = vunpack.c.l.b16 %v990
    %v1000 = vunpack.c.l.b16 %v991
    %v1001 = vunpack.c.l.b16 %v992
    %vm1002 = vcmask 1041409
    %v1003 = vsel %vm1002, %v999, %v998
    %vm1004 = vcmask 1042434
    %v1005 = vsel %vm1004, %v1000, %v1003
    %vm1006 = vcmask 1043459
    %v1007 = vsel %vm1006, %v1001, %v1005
    %v1008 = vpack.c.b16 %v1007, %v1007
    %v1010 = vsel %vm877, %v1008, 0
    %v1013 = vsel %vm877, %v993, 0
    %1015 = vmatpush.bf16.xpose.msra.mxu0 0
    %1016 = vmatpush.bf16.xpose.msra.mxu0 0
    %1017 = vmatpush.bf16.xpose.msra.mxu0 0
    %1018 = vmatpush.bf16.xpose.msra.mxu0 0
    %1019 = vmatpush.bf16.xpose.msra.mxu0 0
    %1020 = vmatpush.bf16.xpose.msra.mxu0 0
    %1021 = vmatpush.bf16.xpose.msra.mxu0 0
    %1022 = vmatpush.bf16.xpose.msra.mxu0 %v1013
    %1023 = vmatmul.bf16.gmra.mxu0 %v1010
    %v1024 = vpop.f32.mrf.mxu0
    %v1025 = vadd.f32 0.0, %v1024
    %v1026 = vpop.f32.mrf.mxu0
    %1027 = vdwg.mxu0
    %v1034 = vunpack.c.l.b16 %v983
    %v1035 = vunpack.c.l.b16 %v984
    %v1036 = vunpack.c.l.b16 %v985
    %v1037 = vunpack.c.l.b16 %v986
    %v1038 = vunpack.c.l.b16 %v987
    %v1039 = vunpack.c.l.b16 %v988
    %v1040 = vsel %vm1002, %v1035, %v1034
    %v1041 = vsel %vm1004, %v1036, %v1040
    %v1042 = vsel %vm1006, %v1037, %v1041
    %vm1043 = vcmask 1044484
    %v1044 = vsel %vm1043, %v1038, %v1042
    %vm1045 = vcmask 1045509
    %v1046 = vsel %vm1045, %v1039, %v1044
    %v1047 = vpack.c.b16 %v1046, %v1046
    %v1049 = vsel %vm145, %v982, 0
    %v1052 = vsel %vm145, %v1047, 0
    %1054 = vmatpush.bf16.xpose.msra.mxu0 0
    %1055 = vmatpush.bf16.xpose.msra.mxu0 0
    %1056 = vmatpush.bf16.xpose.msra.mxu0 0
    %1057 = vmatpush.bf16.xpose.msra.mxu0 0
    %1058 = vmatpush.bf16.xpose.msra.mxu0 0
    %1059 = vmatpush.bf16.xpose.msra.mxu0 0
    %1060 = vmatpush.bf16.xpose.msra.mxu0 0
    %1061 = vmatpush.bf16.xpose.msra.mxu0 %v1052
    %1062 = vmatmul.bf16.gmra.mxu0 %v1049
    %v1063 = vpop.f32.mrf.mxu0
    %v1064 = vadd.f32 %v1025, %v1063
    %v1065 = vpop.f32.mrf.mxu0
    %1066 = vdwg.mxu0
    %s1067 = scalar_lea.vmem %s0, 32
    %v1068 = vld [vmem:[%s1067] sm:$0xf]
    %v1069 = vld [vmem:[%s1067 + $0x4] sm:$0xf]
    %v1070 = vld [vmem:[%s1067 + $0x8] sm:$0xf]
    %v1071 = vld [vmem:[%s1067 + $0xc] sm:$0xf]
    %v1072 = vld [vmem:[%s1067 + $0x10] sm:$0xf]
    %v1073 = vld [vmem:[%s1067 + $0x14] sm:$0xf]
    %v1074 = vld [vmem:[%s1067 + $0x18] sm:$0xf]
    %v1075 = vld [vmem:[%s1067 + $0x1c] sm:$0xf]
    %s1076 = scalar_lea.vmem %s2, 16
    %v1077 = vld [vmem:[%s1076] sm:$0xf]
    %v1078 = vld [vmem:[%s1076 + $0x4] sm:$0xf]
    %v1079 = vld [vmem:[%s1076 + $0x8] sm:$0xf]
    %v1080 = vld [vmem:[%s1076 + $0xc] sm:$0xf]
    %s1081 = scalar_lea.vmem %s3, 1
    %v1082 = vld [vmem:[%s1081] sm:$0x1]
    %s1083 = scalar_lea.vmem %s4, 1
    %v1084 = vld [vmem:[%s1083] sm:$0x1]
    %s1085 = scalar_lea.vmem %s5, 1
    %v1086 = vld [vmem:[%s1085] sm:$0x1]
    %v1088 = vperm.slane %v1082, 0
    %v1098 = vunpack.c.l.b16 %v1068
    %v1099 = vunpack.c.l.b16 %v1069
    %v1100 = vunpack.c.l.b16 %v1070
    %v1101 = vunpack.c.l.b16 %v1071
    %v1102 = vunpack.c.l.b16 %v1072
    %v1103 = vunpack.c.l.b16 %v1073
    %v1104 = vunpack.c.l.b16 %v1074
    %v1105 = vunpack.c.l.b16 %v1075
    %v1106 = vpack.c.b16 %v1099, %v1098
    %v1107 = vpack.c.b16 %v1101, %v1100
    %v1108 = vpack.c.b16 %v1103, %v1102
    %v1109 = vpack.c.b16 %v1105, %v1104
    %v1114 = vunpack.c.l.b16 %v1077
    %v1115 = vunpack.c.l.b16 %v1078
    %v1116 = vunpack.c.l.b16 %v1079
    %v1117 = vunpack.c.l.b16 %v1080
    %v1118 = vpack.c.b16 %v1115, %v1114
    %v1119 = vpack.c.b16 %v1117, %v1116
    %v1123 = vsel %vm103, %v1106, 0
    %v1126 = vsel %vm103, %v1107, 0
    %v1129 = vsel %vm103, %v1108, 0
    %v1132 = vsel %vm103, %v1109, 0
    %1134 = vmatpush.bf16.msra.mxu0 0
    %1135 = vmatpush.bf16.msra.mxu0 0
    %1136 = vmatpush.bf16.msra.mxu0 0
    %1137 = vmatpush.bf16.msra.mxu0 0
    %1138 = vmatpush.bf16.msra.mxu0 0
    %1139 = vmatpush.bf16.msra.mxu0 0
    %1140 = vmatpush.bf16.msra.mxu0 %v1119
    %1141 = vmatpush.bf16.msra.mxu0 %v1118
    %1142 = vmatmul.bf16.gmra.mxu0 %v1123
    %v1143 = vpop.f32.mrf.mxu0
    %v1144 = vadd.f32 %v1088, %v1143
    %v1145 = vpop.f32.mrf.mxu0
    %v1146 = vadd.f32 %v1088, %v1145
    %1147 = vmatmul.bf16.gmra.mxu0 %v1126
    %v1148 = vpop.f32.mrf.mxu0
    %v1149 = vadd.f32 %v1088, %v1148
    %v1150 = vpop.f32.mrf.mxu0
    %v1151 = vadd.f32 %v1088, %v1150
    %1152 = vmatmul.bf16.gmra.mxu0 %v1129
    %v1153 = vpop.f32.mrf.mxu0
    %v1154 = vadd.f32 %v1088, %v1153
    %v1155 = vpop.f32.mrf.mxu0
    %v1156 = vadd.f32 %v1088, %v1155
    %1157 = vmatmul.bf16.gmra.mxu0 %v1132
    %v1158 = vpop.f32.mrf.mxu0
    %v1159 = vadd.f32 %v1088, %v1158
    %v1160 = vpop.f32.mrf.mxu0
    %v1161 = vadd.f32 %v1088, %v1160
    %1162 = vdwg.mxu0
    %v1163 = vsel %vm145, %v1144, 0.0
    %1164 = vadd.xlane.f32.xlu0 %v1163
    %v1165 = vpop.xlane.xlu0 %1164
    %v1166 = vsel %vm145, %v1146, 0.0
    %1167 = vadd.xlane.f32.xlu0 %v1166
    %v1168 = vpop.xlane.xlu0 %1167
    %v1169 = vsel %vm145, %v1149, 0.0
    %1170 = vadd.xlane.f32.xlu0 %v1169
    %v1171 = vpop.xlane.xlu0 %1170
    %v1172 = vsel %vm145, %v1151, 0.0
    %1173 = vadd.xlane.f32.xlu0 %v1172
    %v1174 = vpop.xlane.xlu0 %1173
    %v1175 = vsel %vm145, %v1154, 0.0
    %1176 = vadd.xlane.f32.xlu0 %v1175
    %v1177 = vpop.xlane.xlu0 %1176
    %v1178 = vsel %vm145, %v1156, 0.0
    %1179 = vadd.xlane.f32.xlu0 %v1178
    %v1180 = vpop.xlane.xlu0 %1179
    %v1181 = vsel %vm145, %v1159, 0.0
    %1182 = vadd.xlane.f32.xlu0 %v1181
    %v1183 = vpop.xlane.xlu0 %1182
    %v1184 = vsel %vm145, %v1161, 0.0
    %1185 = vadd.xlane.f32.xlu0 %v1184
    %v1186 = vpop.xlane.xlu0 %1185
    %v1187 = vmul.f32 %v1165, 0.015625
    %v1188 = vmul.f32 %v1168, 0.015625
    %v1189 = vmul.f32 %v1171, 0.015625
    %v1190 = vmul.f32 %v1174, 0.015625
    %v1191 = vmul.f32 %v1177, 0.015625
    %v1192 = vmul.f32 %v1180, 0.015625
    %v1193 = vmul.f32 %v1183, 0.015625
    %v1194 = vmul.f32 %v1186, 0.015625
    %v1195 = vsub.f32 %v1144, %v1187
    %v1196 = vsub.f32 %v1146, %v1188
    %v1197 = vsub.f32 %v1149, %v1189
    %v1198 = vsub.f32 %v1151, %v1190
    %v1199 = vsub.f32 %v1154, %v1191
    %v1200 = vsub.f32 %v1156, %v1192
    %v1201 = vsub.f32 %v1159, %v1193
    %v1202 = vsub.f32 %v1161, %v1194
    %v1203 = vmul.f32 %v1195, %v1195
    %v1204 = vmul.f32 %v1196, %v1196
    %v1205 = vmul.f32 %v1197, %v1197
    %v1206 = vmul.f32 %v1198, %v1198
    %v1207 = vmul.f32 %v1199, %v1199
    %v1208 = vmul.f32 %v1200, %v1200
    %v1209 = vmul.f32 %v1201, %v1201
    %v1210 = vmul.f32 %v1202, %v1202
    %v1211 = vsel %vm145, %v1203, 0.0
    %1212 = vadd.xlane.f32.xlu0 %v1211
    %v1213 = vpop.xlane.xlu0 %1212
    %v1214 = vsel %vm145, %v1204, 0.0
    %1215 = vadd.xlane.f32.xlu0 %v1214
    %v1216 = vpop.xlane.xlu0 %1215
    %v1217 = vsel %vm145, %v1205, 0.0
    %1218 = vadd.xlane.f32.xlu0 %v1217
    %v1219 = vpop.xlane.xlu0 %1218
    %v1220 = vsel %vm145, %v1206, 0.0
    %1221 = vadd.xlane.f32.xlu0 %v1220
    %v1222 = vpop.xlane.xlu0 %1221
    %v1223 = vsel %vm145, %v1207, 0.0
    %1224 = vadd.xlane.f32.xlu0 %v1223
    %v1225 = vpop.xlane.xlu0 %1224
    %v1226 = vsel %vm145, %v1208, 0.0
    %1227 = vadd.xlane.f32.xlu0 %v1226
    %v1228 = vpop.xlane.xlu0 %1227
    %v1229 = vsel %vm145, %v1209, 0.0
    %1230 = vadd.xlane.f32.xlu0 %v1229
    %v1231 = vpop.xlane.xlu0 %1230
    %v1232 = vsel %vm145, %v1210, 0.0
    %1233 = vadd.xlane.f32.xlu0 %v1232
    %v1234 = vpop.xlane.xlu0 %1233
    %v1235 = vmul.f32 %v1213, 0.015625
    %v1236 = vmul.f32 %v1216, 0.015625
    %v1237 = vmul.f32 %v1219, 0.015625
    %v1238 = vmul.f32 %v1222, 0.015625
    %v1239 = vmul.f32 %v1225, 0.015625
    %v1240 = vmul.f32 %v1228, 0.015625
    %v1241 = vmul.f32 %v1231, 0.015625
    %v1242 = vmul.f32 %v1234, 0.015625
    %v1243 = vadd.f32 %v1235, 1e-05
    %v1244 = vadd.f32 %v1236, 1e-05
    %v1245 = vadd.f32 %v1237, 1e-05
    %v1246 = vadd.f32 %v1238, 1e-05
    %v1247 = vadd.f32 %v1239, 1e-05
    %v1248 = vadd.f32 %v1240, 1e-05
    %v1249 = vadd.f32 %v1241, 1e-05
    %v1250 = vadd.f32 %v1242, 1e-05
    %v1251 = vrsqrt.pop %v1243
    %v1252 = vmul.f32 %v1251, %v1243
    %v1253 = vmul.f32 %v1252, %v1251
    %v1254 = vmul.f32 0.5, %v1253
    %v1255 = vsub.f32 1.5, %v1254
    %v1256 = vmul.f32 %v1251, %v1255
    %vm1257 = vweird.f32 %v1243
    %vm1258 = vweird.f32 %v1251
    %vm1259 = vmor %vm1257, %vm1258
    %v1260 = vsel %vm1259, %v1251, %v1256
    %v1261 = vrsqrt.pop %v1244
    %v1262 = vmul.f32 %v1261, %v1244
    %v1263 = vmul.f32 %v1262, %v1261
    %v1264 = vmul.f32 0.5, %v1263
    %v1265 = vsub.f32 1.5, %v1264
    %v1266 = vmul.f32 %v1261, %v1265
    %vm1267 = vweird.f32 %v1244
    %vm1268 = vweird.f32 %v1261
    %vm1269 = vmor %vm1267, %vm1268
    %v1270 = vsel %vm1269, %v1261, %v1266
    %v1271 = vrsqrt.pop %v1245
    %v1272 = vmul.f32 %v1271, %v1245
    %v1273 = vmul.f32 %v1272, %v1271
    %v1274 = vmul.f32 0.5, %v1273
    %v1275 = vsub.f32 1.5, %v1274
    %v1276 = vmul.f32 %v1271, %v1275
    %vm1277 = vweird.f32 %v1245
    %vm1278 = vweird.f32 %v1271
    %vm1279 = vmor %vm1277, %vm1278
    %v1280 = vsel %vm1279, %v1271, %v1276
    %v1281 = vrsqrt.pop %v1246
    %v1282 = vmul.f32 %v1281, %v1246
    %v1283 = vmul.f32 %v1282, %v1281
    %v1284 = vmul.f32 0.5, %v1283
    %v1285 = vsub.f32 1.5, %v1284
    %v1286 = vmul.f32 %v1281, %v1285
    %vm1287 = vweird.f32 %v1246
    %vm1288 = vweird.f32 %v1281
    %vm1289 = vmor %vm1287, %vm1288
    %v1290 = vsel %vm1289, %v1281, %v1286
    %v1291 = vrsqrt.pop %v1247
    %v1292 = vmul.f32 %v1291, %v1247
    %v1293 = vmul.f32 %v1292, %v1291
    %v1294 = vmul.f32 0.5, %v1293
    %v1295 = vsub.f32 1.5, %v1294
    %v1296 = vmul.f32 %v1291, %v1295
    %vm1297 = vweird.f32 %v1247
    %vm1298 = vweird.f32 %v1291
    %vm1299 = vmor %vm1297, %vm1298
    %v1300 = vsel %vm1299, %v1291, %v1296
    %v1301 = vrsqrt.pop %v1248
    %v1302 = vmul.f32 %v1301, %v1248
    %v1303 = vmul.f32 %v1302, %v1301
    %v1304 = vmul.f32 0.5, %v1303
    %v1305 = vsub.f32 1.5, %v1304
    %v1306 = vmul.f32 %v1301, %v1305
    %vm1307 = vweird.f32 %v1248
    %vm1308 = vweird.f32 %v1301
    %vm1309 = vmor %vm1307, %vm1308
    %v1310 = vsel %vm1309, %v1301, %v1306
    %v1311 = vrsqrt.pop %v1249
    %v1312 = vmul.f32 %v1311, %v1249
    %v1313 = vmul.f32 %v1312, %v1311
    %v1314 = vmul.f32 0.5, %v1313
    %v1315 = vsub.f32 1.5, %v1314
    %v1316 = vmul.f32 %v1311, %v1315
    %vm1317 = vweird.f32 %v1249
    %vm1318 = vweird.f32 %v1311
    %vm1319 = vmor %vm1317, %vm1318
    %v1320 = vsel %vm1319, %v1311, %v1316
    %v1321 = vrsqrt.pop %v1250
    %v1322 = vmul.f32 %v1321, %v1250
    %v1323 = vmul.f32 %v1322, %v1321
    %v1324 = vmul.f32 0.5, %v1323
    %v1325 = vsub.f32 1.5, %v1324
    %v1326 = vmul.f32 %v1321, %v1325
    %vm1327 = vweird.f32 %v1250
    %vm1328 = vweird.f32 %v1321
    %vm1329 = vmor %vm1327, %vm1328
    %v1330 = vsel %vm1329, %v1321, %v1326
    %v1331 = vmul.f32 %v1195, %v1260
    %v1332 = vmul.f32 %v1196, %v1270
    %v1333 = vmul.f32 %v1197, %v1280
    %v1334 = vmul.f32 %v1198, %v1290
    %v1335 = vmul.f32 %v1199, %v1300
    %v1336 = vmul.f32 %v1200, %v1310
    %v1337 = vmul.f32 %v1201, %v1320
    %v1338 = vmul.f32 %v1202, %v1330
    %v1340 = vperm.slane %v1084, 0
    %v1342 = vmul.f32 %v1331, %v1340
    %v1343 = vmul.f32 %v1332, %v1340
    %v1344 = vmul.f32 %v1333, %v1340
    %v1345 = vmul.f32 %v1334, %v1340
    %v1346 = vmul.f32 %v1335, %v1340
    %v1347 = vmul.f32 %v1336, %v1340
    %v1348 = vmul.f32 %v1337, %v1340
    %v1349 = vmul.f32 %v1338, %v1340
    %v1351 = vperm.slane %v1086, 0
    %v1353 = vadd.f32 %v1342, %v1351
    %v1354 = vadd.f32 %v1343, %v1351
    %v1355 = vadd.f32 %v1344, %v1351
    %v1356 = vadd.f32 %v1345, %v1351
    %v1357 = vadd.f32 %v1346, %v1351
    %v1358 = vadd.f32 %v1347, %v1351
    %v1359 = vadd.f32 %v1348, %v1351
    %v1360 = vadd.f32 %v1349, %v1351
    %s1361 = scalar_lea.vmem %s1, 48
    %v1362 = vld [vmem:[%s1361] sm:$0xf]
    %v1363 = vld [vmem:[%s1361 + $0x4] sm:$0xf]
    %v1364 = vld [vmem:[%s1361 + $0x8] sm:$0xf]
    %v1365 = vld [vmem:[%s1361 + $0xc] sm:$0xf]
    %v1366 = vld [vmem:[%s1361 + $0x10] sm:$0xf]
    %v1367 = vld [vmem:[%s1361 + $0x14] sm:$0xf]
    %v1368 = vld [vmem:[%s1361 + $0x18] sm:$0xf]
    %v1369 = vld [vmem:[%s1361 + $0x1c] sm:$0xf]
    %v1370 = vld [vmem:[%s1361 + $0x20] sm:$0xf]
    %v1371 = vld [vmem:[%s1361 + $0x24] sm:$0xf]
    %v1372 = vld [vmem:[%s1361 + $0x28] sm:$0xf]
    %v1373 = vld [vmem:[%s1361 + $0x2c] sm:$0xf]
    %s1374 = scalar_lea.vmem %s6, 16
    %v1375 = vld [vmem:[%s1374] sm:$0xf]
    %v1376 = vld [vmem:[%s1374 + $0x4] sm:$0xf]
    %v1377 = vld [vmem:[%s1374 + $0x8] sm:$0xf]
    %v1378 = vld [vmem:[%s1374 + $0xc] sm:$0xf]
    %s1379 = scalar_lea.vmem %s7, 1
    %v1380 = vld [vmem:[%s1379] sm:$0x1]
    %s1381 = scalar_lea.vmem %s8, 1
    %v1382 = vld [vmem:[%s1381] sm:$0x1]
    %s1383 = scalar_lea.vmem %s9, 1
    %v1384 = vld [vmem:[%s1383] sm:$0x1]
    %v1386 = vperm.slane %v1380, 0
    %v1400 = vunpack.c.l.b16 %v1362
    %v1401 = vunpack.c.l.b16 %v1363
    %v1402 = vunpack.c.l.b16 %v1364
    %v1403 = vunpack.c.l.b16 %v1365
    %v1404 = vunpack.c.l.b16 %v1366
    %v1405 = vunpack.c.l.b16 %v1367
    %v1406 = vunpack.c.l.b16 %v1368
    %v1407 = vunpack.c.l.b16 %v1369
    %v1408 = vunpack.c.l.b16 %v1370
    %v1409 = vunpack.c.l.b16 %v1371
    %v1410 = vunpack.c.l.b16 %v1372
    %v1411 = vunpack.c.l.b16 %v1373
    %v1412 = vpack.c.b16 %v1401, %v1400
    %v1413 = vpack.c.b16 %v1403, %v1402
    %v1414 = vpack.c.b16 %v1405, %v1404
    %v1415 = vpack.c.b16 %v1407, %v1406
    %v1416 = vpack.c.b16 %v1409, %v1408
    %v1417 = vpack.c.b16 %v1411, %v1410
    %v1422 = vunpack.c.l.b16 %v1375
    %v1423 = vunpack.c.l.b16 %v1376
    %v1424 = vunpack.c.l.b16 %v1377
    %v1425 = vunpack.c.l.b16 %v1378
    %v1426 = vpack.c.b16 %v1423, %v1422
    %v1427 = vpack.c.b16 %v1425, %v1424
    %v1431 = vsel %vm103, %v1412, 0
    %v1434 = vsel %vm103, %v1413, 0
    %v1437 = vsel %vm103, %v1414, 0
    %v1440 = vsel %vm103, %v1415, 0
    %v1443 = vsel %vm103, %v1416, 0
    %v1446 = vsel %vm103, %v1417, 0
    %1448 = vmatpush.bf16.msra.mxu0 0
    %1449 = vmatpush.bf16.msra.mxu0 0
    %1450 = vmatpush.bf16.msra.mxu0 0
    %1451 = vmatpush.bf16.msra.mxu0 0
    %1452 = vmatpush.bf16.msra.mxu0 0
    %1453 = vmatpush.bf16.msra.mxu0 0
    %1454 = vmatpush.bf16.msra.mxu0 %v1427
    %1455 = vmatpush.bf16.msra.mxu0 %v1426
    %1456 = vmatmul.bf16.gmra.mxu0 %v1431
    %v1457 = vpop.f32.mrf.mxu0
    %v1458 = vadd.f32 %v1386, %v1457
    %v1459 = vpop.f32.mrf.mxu0
    %v1460 = vadd.f32 %v1386, %v1459
    %1461 = vmatmul.bf16.gmra.mxu0 %v1434
    %v1462 = vpop.f32.mrf.mxu0
    %v1463 = vadd.f32 %v1386, %v1462
    %v1464 = vpop.f32.mrf.mxu0
    %v1465 = vadd.f32 %v1386, %v1464
    %1466 = vmatmul.bf16.gmra.mxu0 %v1437
    %v1467 = vpop.f32.mrf.mxu0
    %v1468 = vadd.f32 %v1386, %v1467
    %v1469 = vpop.f32.mrf.mxu0
    %v1470 = vadd.f32 %v1386, %v1469
    %1471 = vmatmul.bf16.gmra.mxu0 %v1440
    %v1472 = vpop.f32.mrf.mxu0
    %v1473 = vadd.f32 %v1386, %v1472
    %v1474 = vpop.f32.mrf.mxu0
    %v1475 = vadd.f32 %v1386, %v1474
    %1476 = vmatmul.bf16.gmra.mxu0 %v1443
    %v1477 = vpop.f32.mrf.mxu0
    %v1478 = vadd.f32 %v1386, %v1477
    %v1479 = vpop.f32.mrf.mxu0
    %v1480 = vadd.f32 %v1386, %v1479
    %1481 = vmatmul.bf16.gmra.mxu0 %v1446
    %v1482 = vpop.f32.mrf.mxu0
    %v1483 = vadd.f32 %v1386, %v1482
    %v1484 = vpop.f32.mrf.mxu0
    %v1485 = vadd.f32 %v1386, %v1484
    %1486 = vdwg.mxu0
    %v1487 = vsel %vm145, %v1458, 0.0
    %1488 = vadd.xlane.f32.xlu0 %v1487
    %v1489 = vpop.xlane.xlu0 %1488
    %v1490 = vsel %vm145, %v1460, 0.0
    %1491 = vadd.xlane.f32.xlu0 %v1490
    %v1492 = vpop.xlane.xlu0 %1491
    %v1493 = vsel %vm145, %v1463, 0.0
    %1494 = vadd.xlane.f32.xlu0 %v1493
    %v1495 = vpop.xlane.xlu0 %1494
    %v1496 = vsel %vm145, %v1465, 0.0
    %1497 = vadd.xlane.f32.xlu0 %v1496
    %v1498 = vpop.xlane.xlu0 %1497
    %v1499 = vsel %vm145, %v1468, 0.0
    %1500 = vadd.xlane.f32.xlu0 %v1499
    %v1501 = vpop.xlane.xlu0 %1500
    %v1502 = vsel %vm145, %v1470, 0.0
    %1503 = vadd.xlane.f32.xlu0 %v1502
    %v1504 = vpop.xlane.xlu0 %1503
    %v1505 = vsel %vm145, %v1473, 0.0
    %1506 = vadd.xlane.f32.xlu0 %v1505
    %v1507 = vpop.xlane.xlu0 %1506
    %v1508 = vsel %vm145, %v1475, 0.0
    %1509 = vadd.xlane.f32.xlu0 %v1508
    %v1510 = vpop.xlane.xlu0 %1509
    %v1511 = vsel %vm145, %v1478, 0.0
    %1512 = vadd.xlane.f32.xlu0 %v1511
    %v1513 = vpop.xlane.xlu0 %1512
    %v1514 = vsel %vm145, %v1480, 0.0
    %1515 = vadd.xlane.f32.xlu0 %v1514
    %v1516 = vpop.xlane.xlu0 %1515
    %v1517 = vsel %vm145, %v1483, 0.0
    %1518 = vadd.xlane.f32.xlu0 %v1517
    %v1519 = vpop.xlane.xlu0 %1518
    %v1520 = vsel %vm145, %v1485, 0.0
    %1521 = vadd.xlane.f32.xlu0 %v1520
    %v1522 = vpop.xlane.xlu0 %1521
    %v1523 = vmul.f32 %v1489, 0.015625
    %v1524 = vmul.f32 %v1492, 0.015625
    %v1525 = vmul.f32 %v1495, 0.015625
    %v1526 = vmul.f32 %v1498, 0.015625
    %v1527 = vmul.f32 %v1501, 0.015625
    %v1528 = vmul.f32 %v1504, 0.015625
    %v1529 = vmul.f32 %v1507, 0.015625
    %v1530 = vmul.f32 %v1510, 0.015625
    %v1531 = vmul.f32 %v1513, 0.015625
    %v1532 = vmul.f32 %v1516, 0.015625
    %v1533 = vmul.f32 %v1519, 0.015625
    %v1534 = vmul.f32 %v1522, 0.015625
    %v1535 = vsub.f32 %v1458, %v1523
    %v1536 = vsub.f32 %v1460, %v1524
    %v1537 = vsub.f32 %v1463, %v1525
    %v1538 = vsub.f32 %v1465, %v1526
    %v1539 = vsub.f32 %v1468, %v1527
    %v1540 = vsub.f32 %v1470, %v1528
    %v1541 = vsub.f32 %v1473, %v1529
    %v1542 = vsub.f32 %v1475, %v1530
    %v1543 = vsub.f32 %v1478, %v1531
    %v1544 = vsub.f32 %v1480, %v1532
    %v1545 = vsub.f32 %v1483, %v1533
    %v1546 = vsub.f32 %v1485, %v1534
    %v1547 = vmul.f32 %v1535, %v1535
    %v1548 = vmul.f32 %v1536, %v1536
    %v1549 = vmul.f32 %v1537, %v1537
    %v1550 = vmul.f32 %v1538, %v1538
    %v1551 = vmul.f32 %v1539, %v1539
    %v1552 = vmul.f32 %v1540, %v1540
    %v1553 = vmul.f32 %v1541, %v1541
    %v1554 = vmul.f32 %v1542, %v1542
    %v1555 = vmul.f32 %v1543, %v1543
    %v1556 = vmul.f32 %v1544, %v1544
    %v1557 = vmul.f32 %v1545, %v1545
    %v1558 = vmul.f32 %v1546, %v1546
    %v1559 = vsel %vm145, %v1547, 0.0
    %1560 = vadd.xlane.f32.xlu0 %v1559
    %v1561 = vpop.xlane.xlu0 %1560
    %v1562 = vsel %vm145, %v1548, 0.0
    %1563 = vadd.xlane.f32.xlu0 %v1562
    %v1564 = vpop.xlane.xlu0 %1563
    %v1565 = vsel %vm145, %v1549, 0.0
    %1566 = vadd.xlane.f32.xlu0 %v1565
    %v1567 = vpop.xlane.xlu0 %1566
    %v1568 = vsel %vm145, %v1550, 0.0
    %1569 = vadd.xlane.f32.xlu0 %v1568
    %v1570 = vpop.xlane.xlu0 %1569
    %v1571 = vsel %vm145, %v1551, 0.0
    %1572 = vadd.xlane.f32.xlu0 %v1571
    %v1573 = vpop.xlane.xlu0 %1572
    %v1574 = vsel %vm145, %v1552, 0.0
    %1575 = vadd.xlane.f32.xlu0 %v1574
    %v1576 = vpop.xlane.xlu0 %1575
    %v1577 = vsel %vm145, %v1553, 0.0
    %1578 = vadd.xlane.f32.xlu0 %v1577
    %v1579 = vpop.xlane.xlu0 %1578
    %v1580 = vsel %vm145, %v1554, 0.0
    %1581 = vadd.xlane.f32.xlu0 %v1580
    %v1582 = vpop.xlane.xlu0 %1581
    %v1583 = vsel %vm145, %v1555, 0.0
    %1584 = vadd.xlane.f32.xlu0 %v1583
    %v1585 = vpop.xlane.xlu0 %1584
    %v1586 = vsel %vm145, %v1556, 0.0
    %1587 = vadd.xlane.f32.xlu0 %v1586
    %v1588 = vpop.xlane.xlu0 %1587
    %v1589 = vsel %vm145, %v1557, 0.0
    %1590 = vadd.xlane.f32.xlu0 %v1589
    %v1591 = vpop.xlane.xlu0 %1590
    %v1592 = vsel %vm145, %v1558, 0.0
    %1593 = vadd.xlane.f32.xlu0 %v1592
    %v1594 = vpop.xlane.xlu0 %1593
    %v1595 = vmul.f32 %v1561, 0.015625
    %v1596 = vmul.f32 %v1564, 0.015625
    %v1597 = vmul.f32 %v1567, 0.015625
    %v1598 = vmul.f32 %v1570, 0.015625
    %v1599 = vmul.f32 %v1573, 0.015625
    %v1600 = vmul.f32 %v1576, 0.015625
    %v1601 = vmul.f32 %v1579, 0.015625
    %v1602 = vmul.f32 %v1582, 0.015625
    %v1603 = vmul.f32 %v1585, 0.015625
    %v1604 = vmul.f32 %v1588, 0.015625
    %v1605 = vmul.f32 %v1591, 0.015625
    %v1606 = vmul.f32 %v1594, 0.015625
    %v1607 = vadd.f32 %v1595, 1e-05
    %v1608 = vadd.f32 %v1596, 1e-05
    %v1609 = vadd.f32 %v1597, 1e-05
    %v1610 = vadd.f32 %v1598, 1e-05
    %v1611 = vadd.f32 %v1599, 1e-05
    %v1612 = vadd.f32 %v1600, 1e-05
    %v1613 = vadd.f32 %v1601, 1e-05
    %v1614 = vadd.f32 %v1602, 1e-05
    %v1615 = vadd.f32 %v1603, 1e-05
    %v1616 = vadd.f32 %v1604, 1e-05
    %v1617 = vadd.f32 %v1605, 1e-05
    %v1618 = vadd.f32 %v1606, 1e-05
    %v1619 = vrsqrt.pop %v1607
    %v1620 = vmul.f32 %v1619, %v1607
    %v1621 = vmul.f32 %v1620, %v1619
    %v1622 = vmul.f32 0.5, %v1621
    %v1623 = vsub.f32 1.5, %v1622
    %v1624 = vmul.f32 %v1619, %v1623
    %vm1625 = vweird.f32 %v1607
    %vm1626 = vweird.f32 %v1619
    %vm1627 = vmor %vm1625, %vm1626
    %v1628 = vsel %vm1627, %v1619, %v1624
    %v1629 = vrsqrt.pop %v1608
    %v1630 = vmul.f32 %v1629, %v1608
    %v1631 = vmul.f32 %v1630, %v1629
    %v1632 = vmul.f32 0.5, %v1631
    %v1633 = vsub.f32 1.5, %v1632
    %v1634 = vmul.f32 %v1629, %v1633
    %vm1635 = vweird.f32 %v1608
    %vm1636 = vweird.f32 %v1629
    %vm1637 = vmor %vm1635, %vm1636
    %v1638 = vsel %vm1637, %v1629, %v1634
    %v1639 = vrsqrt.pop %v1609
    %v1640 = vmul.f32 %v1639, %v1609
    %v1641 = vmul.f32 %v1640, %v1639
    %v1642 = vmul.f32 0.5, %v1641
    %v1643 = vsub.f32 1.5, %v1642
    %v1644 = vmul.f32 %v1639, %v1643
    %vm1645 = vweird.f32 %v1609
    %vm1646 = vweird.f32 %v1639
    %vm1647 = vmor %vm1645, %vm1646
    %v1648 = vsel %vm1647, %v1639, %v1644
    %v1649 = vrsqrt.pop %v1610
    %v1650 = vmul.f32 %v1649, %v1610
    %v1651 = vmul.f32 %v1650, %v1649
    %v1652 = vmul.f32 0.5, %v1651
    %v1653 = vsub.f32 1.5, %v1652
    %v1654 = vmul.f32 %v1649, %v1653
    %vm1655 = vweird.f32 %v1610
    %vm1656 = vweird.f32 %v1649
    %vm1657 = vmor %vm1655, %vm1656
    %v1658 = vsel %vm1657, %v1649, %v1654
    %v1659 = vrsqrt.pop %v1611
    %v1660 = vmul.f32 %v1659, %v1611
    %v1661 = vmul.f32 %v1660, %v1659
    %v1662 = vmul.f32 0.5, %v1661
    %v1663 = vsub.f32 1.5, %v1662
    %v1664 = vmul.f32 %v1659, %v1663
    %vm1665 = vweird.f32 %v1611
    %vm1666 = vweird.f32 %v1659
    %vm1667 = vmor %vm1665, %vm1666
    %v1668 = vsel %vm1667, %v1659, %v1664
    %v1669 = vrsqrt.pop %v1612
    %v1670 = vmul.f32 %v1669, %v1612
    %v1671 = vmul.f32 %v1670, %v1669
    %v1672 = vmul.f32 0.5, %v1671
    %v1673 = vsub.f32 1.5, %v1672
    %v1674 = vmul.f32 %v1669, %v1673
    %vm1675 = vweird.f32 %v1612
    %vm1676 = vweird.f32 %v1669
    %vm1677 = vmor %vm1675, %vm1676
    %v1678 = vsel %vm1677, %v1669, %v1674
    %v1679 = vrsqrt.pop %v1613
    %v1680 = vmul.f32 %v1679, %v1613
    %v1681 = vmul.f32 %v1680, %v1679
    %v1682 = vmul.f32 0.5, %v1681
    %v1683 = vsub.f32 1.5, %v1682
    %v1684 = vmul.f32 %v1679, %v1683
    %vm1685 = vweird.f32 %v1613
    %vm1686 = vweird.f32 %v1679
    %vm1687 = vmor %vm1685, %vm1686
    %v1688 = vsel %vm1687, %v1679, %v1684
    %v1689 = vrsqrt.pop %v1614
    %v1690 = vmul.f32 %v1689, %v1614
    %v1691 = vmul.f32 %v1690, %v1689
    %v1692 = vmul.f32 0.5, %v1691
    %v1693 = vsub.f32 1.5, %v1692
    %v1694 = vmul.f32 %v1689, %v1693
    %vm1695 = vweird.f32 %v1614
    %vm1696 = vweird.f32 %v1689
    %vm1697 = vmor %vm1695, %vm1696
    %v1698 = vsel %vm1697, %v1689, %v1694
    %v1699 = vrsqrt.pop %v1615
    %v1700 = vmul.f32 %v1699, %v1615
    %v1701 = vmul.f32 %v1700, %v1699
    %v1702 = vmul.f32 0.5, %v1701
    %v1703 = vsub.f32 1.5, %v1702
    %v1704 = vmul.f32 %v1699, %v1703
    %vm1705 = vweird.f32 %v1615
    %vm1706 = vweird.f32 %v1699
    %vm1707 = vmor %vm1705, %vm1706
    %v1708 = vsel %vm1707, %v1699, %v1704
    %v1709 = vrsqrt.pop %v1616
    %v1710 = vmul.f32 %v1709, %v1616
    %v1711 = vmul.f32 %v1710, %v1709
    %v1712 = vmul.f32 0.5, %v1711
    %v1713 = vsub.f32 1.5, %v1712
    %v1714 = vmul.f32 %v1709, %v1713
    %vm1715 = vweird.f32 %v1616
    %vm1716 = vweird.f32 %v1709
    %vm1717 = vmor %vm1715, %vm1716
    %v1718 = vsel %vm1717, %v1709, %v1714
    %v1719 = vrsqrt.pop %v1617
    %v1720 = vmul.f32 %v1719, %v1617
    %v1721 = vmul.f32 %v1720, %v1719
    %v1722 = vmul.f32 0.5, %v1721
    %v1723 = vsub.f32 1.5, %v1722
    %v1724 = vmul.f32 %v1719, %v1723
    %vm1725 = vweird.f32 %v1617
    %vm1726 = vweird.f32 %v1719
    %vm1727 = vmor %vm1725, %vm1726
    %v1728 = vsel %vm1727, %v1719, %v1724
    %v1729 = vrsqrt.pop %v1618
    %v1730 = vmul.f32 %v1729, %v1618
    %v1731 = vmul.f32 %v1730, %v1729
    %v1732 = vmul.f32 0.5, %v1731
    %v1733 = vsub.f32 1.5, %v1732
    %v1734 = vmul.f32 %v1729, %v1733
    %vm1735 = vweird.f32 %v1618
    %vm1736 = vweird.f32 %v1729
    %vm1737 = vmor %vm1735, %vm1736
    %v1738 = vsel %vm1737, %v1729, %v1734
    %v1739 = vmul.f32 %v1535, %v1628
    %v1740 = vmul.f32 %v1536, %v1638
    %v1741 = vmul.f32 %v1537, %v1648
    %v1742 = vmul.f32 %v1538, %v1658
    %v1743 = vmul.f32 %v1539, %v1668
    %v1744 = vmul.f32 %v1540, %v1678
    %v1745 = vmul.f32 %v1541, %v1688
    %v1746 = vmul.f32 %v1542, %v1698
    %v1747 = vmul.f32 %v1543, %v1708
    %v1748 = vmul.f32 %v1544, %v1718
    %v1749 = vmul.f32 %v1545, %v1728
    %v1750 = vmul.f32 %v1546, %v1738
    %v1752 = vperm.slane %v1382, 0
    %v1754 = vmul.f32 %v1739, %v1752
    %v1755 = vmul.f32 %v1740, %v1752
    %v1756 = vmul.f32 %v1741, %v1752
    %v1757 = vmul.f32 %v1742, %v1752
    %v1758 = vmul.f32 %v1743, %v1752
    %v1759 = vmul.f32 %v1744, %v1752
    %v1760 = vmul.f32 %v1745, %v1752
    %v1761 = vmul.f32 %v1746, %v1752
    %v1762 = vmul.f32 %v1747, %v1752
    %v1763 = vmul.f32 %v1748, %v1752
    %v1764 = vmul.f32 %v1749, %v1752
    %v1765 = vmul.f32 %v1750, %v1752
    %v1767 = vperm.slane %v1384, 0
    %v1769 = vadd.f32 %v1754, %v1767
    %v1770 = vadd.f32 %v1755, %v1767
    %v1771 = vadd.f32 %v1756, %v1767
    %v1772 = vadd.f32 %v1757, %v1767
    %v1773 = vadd.f32 %v1758, %v1767
    %v1774 = vadd.f32 %v1759, %v1767
    %v1775 = vadd.f32 %v1760, %v1767
    %v1776 = vadd.f32 %v1761, %v1767
    %v1777 = vadd.f32 %v1762, %v1767
    %v1778 = vadd.f32 %v1763, %v1767
    %v1779 = vadd.f32 %v1764, %v1767
    %v1780 = vadd.f32 %v1765, %v1767
    %v1781 = vpack.c.bf16 %v1354, %v1353
    %v1782 = vpack.c.bf16 %v1356, %v1355
    %v1783 = vpack.c.bf16 %v1358, %v1357
    %v1784 = vpack.c.bf16 %v1360, %v1359
    %v1785 = vpack.c.bf16 %v1770, %v1769
    %v1786 = vpack.c.bf16 %v1772, %v1771
    %v1787 = vpack.c.bf16 %v1774, %v1773
    %v1788 = vpack.c.bf16 %v1776, %v1775
    %v1789 = vpack.c.bf16 %v1778, %v1777
    %v1790 = vpack.c.bf16 %v1780, %v1779
    %v1792 = vsel %vm145, %v1781, 0
    %v1795 = vsel %vm145, %v1782, 0
    %v1798 = vsel %vm145, %v1783, 0
    %v1801 = vsel %vm145, %v1784, 0
    %v1804 = vsel %vm145, %v1785, 0
    %v1807 = vsel %vm145, %v1786, 0
    %v1810 = vsel %vm145, %v1787, 0
    %v1813 = vsel %vm145, %v1788, 0
    %v1816 = vsel %vm145, %v1789, 0
    %v1819 = vsel %vm145, %v1790, 0
    %1821 = vmatpush.bf16.xpose.msra.mxu0 0
    %1822 = vmatpush.bf16.xpose.msra.mxu0 0
    %1823 = vmatpush.bf16.xpose.msra.mxu0 %v1819
    %1824 = vmatpush.bf16.xpose.msra.mxu0 %v1816
    %1825 = vmatpush.bf16.xpose.msra.mxu0 %v1813
    %1826 = vmatpush.bf16.xpose.msra.mxu0 %v1810
    %1827 = vmatpush.bf16.xpose.msra.mxu0 %v1807
    %1828 = vmatpush.bf16.xpose.msra.mxu0 %v1804
    %1829 = vmatmul.bf16.gmra.mxu0 %v1792
    %v1830 = vpop.f32.mrf.mxu0
    %v1831 = vadd.f32 0.0, %v1830
    %v1832 = vpop.f32.mrf.mxu0
    %v1833 = vadd.f32 0.0, %v1832
    %1834 = vmatmul.bf16.gmra.mxu0 %v1795
    %v1835 = vpop.f32.mrf.mxu0
    %v1836 = vadd.f32 0.0, %v1835
    %v1837 = vpop.f32.mrf.mxu0
    %v1838 = vadd.f32 0.0, %v1837
    %1839 = vmatmul.bf16.gmra.mxu0 %v1798
    %v1840 = vpop.f32.mrf.mxu0
    %v1841 = vadd.f32 0.0, %v1840
    %v1842 = vpop.f32.mrf.mxu0
    %v1843 = vadd.f32 0.0, %v1842
    %1844 = vmatmul.bf16.gmra.mxu0 %v1801
    %v1845 = vpop.f32.mrf.mxu0
    %v1846 = vadd.f32 0.0, %v1845
    %v1847 = vpop.f32.mrf.mxu0
    %v1848 = vadd.f32 0.0, %v1847
    %1849 = vdwg.mxu0
    %1850 = vmatpush.bf16.xpose.msra.mxu0 0
    %1851 = vmatpush.bf16.xpose.msra.mxu0 0
    %1852 = vmatpush.bf16.xpose.msra.mxu0 0
    %1853 = vmatpush.bf16.xpose.msra.mxu0 0
    %1854 = vmatpush.bf16.xpose.msra.mxu0 %v1801
    %1855 = vmatpush.bf16.xpose.msra.mxu0 %v1798
    %1856 = vmatpush.bf16.xpose.msra.mxu0 %v1795
    %1857 = vmatpush.bf16.xpose.msra.mxu0 %v1792
    %1858 = vmatmul.bf16.gmra.mxu0 %v1804
    %v1859 = vpop.f32.mrf.mxu0
    %v1860 = vadd.f32 0.0, %v1859
    %v1861 = vpop.f32.mrf.mxu0
    %v1862 = vadd.f32 0.0, %v1861
    %1863 = vmatmul.bf16.gmra.mxu0 %v1807
    %v1864 = vpop.f32.mrf.mxu0
    %v1865 = vadd.f32 0.0, %v1864
    %v1866 = vpop.f32.mrf.mxu0
    %v1867 = vadd.f32 0.0, %v1866
    %1868 = vmatmul.bf16.gmra.mxu0 %v1810
    %v1869 = vpop.f32.mrf.mxu0
    %v1870 = vadd.f32 0.0, %v1869
    %v1871 = vpop.f32.mrf.mxu0
    %v1872 = vadd.f32 0.0, %v1871
    %1873 = vmatmul.bf16.gmra.mxu0 %v1813
    %v1874 = vpop.f32.mrf.mxu0
    %v1875 = vadd.f32 0.0, %v1874
    %v1876 = vpop.f32.mrf.mxu0
    %v1877 = vadd.f32 0.0, %v1876
    %1878 = vmatmul.bf16.gmra.mxu0 %v1816
    %v1879 = vpop.f32.mrf.mxu0
    %v1880 = vadd.f32 0.0, %v1879
    %v1881 = vpop.f32.mrf.mxu0
    %v1882 = vadd.f32 0.0, %v1881
    %1883 = vmatmul.bf16.gmra.mxu0 %v1819
    %v1884 = vpop.f32.mrf.mxu0
    %v1885 = vadd.f32 0.0, %v1884
    %v1886 = vpop.f32.mrf.mxu0
    %v1887 = vadd.f32 0.0, %v1886
    %1888 = vdwg.mxu0
    %s1889 = scalar_lea.vmem %s10, 16
    %v1890 = vld [vmem:[%s1889] sm:$0xff]
    %v1891 = vld [vmem:[%s1889 + $0x8] sm:$0xff]
    %v1892 = vmul.f32 %v1831, %v1890
    %v1893 = vmul.f32 %v1833, %v1891
    %v1894 = vmul.f32 %v1836, %v1890
    %v1895 = vmul.f32 %v1838, %v1891
    %v1896 = vmul.f32 %v1841, %v1890
    %v1897 = vmul.f32 %v1843, %v1891
    %v1898 = vmul.f32 %v1846, %v1890
    %v1899 = vmul.f32 %v1848, %v1891
    %v1900 = vsel %vm877, %v1892, -inf
    %v1901 = vsel %vm877, %v1893, -inf
    %v1902 = vmax.f32 %v1900, %v1901
    %v1903 = vrot.slane %v1902, 4
    %v1904 = vmax.f32 %v1902, %v1903
    %v1905 = vrot.slane %v1904, 2
    %v1906 = vmax.f32 %v1904, %v1905
    %v1907 = vrot.slane %v1906, 1
    %v1908 = vmax.f32 %v1906, %v1907
    %v1909 = vsel %vm877, %v1894, -inf
    %v1910 = vsel %vm877, %v1895, -inf
    %v1911 = vmax.f32 %v1909, %v1910
    %v1912 = vrot.slane %v1911, 4
    %v1913 = vmax.f32 %v1911, %v1912
    %v1914 = vrot.slane %v1913, 2
    %v1915 = vmax.f32 %v1913, %v1914
    %v1916 = vrot.slane %v1915, 1
    %v1917 = vmax.f32 %v1915, %v1916
    %v1918 = vsel %vm877, %v1896, -inf
    %v1919 = vsel %vm877, %v1897, -inf
    %v1920 = vmax.f32 %v1918, %v1919
    %v1921 = vrot.slane %v1920, 4
    %v1922 = vmax.f32 %v1920, %v1921
    %v1923 = vrot.slane %v1922, 2
    %v1924 = vmax.f32 %v1922, %v1923
    %v1925 = vrot.slane %v1924, 1
    %v1926 = vmax.f32 %v1924, %v1925
    %v1927 = vsel %vm877, %v1898, -inf
    %v1928 = vsel %vm877, %v1899, -inf
    %v1929 = vmax.f32 %v1927, %v1928
    %v1930 = vrot.slane %v1929, 4
    %v1931 = vmax.f32 %v1929, %v1930
    %v1932 = vrot.slane %v1931, 2
    %v1933 = vmax.f32 %v1931, %v1932
    %v1934 = vrot.slane %v1933, 1
    %v1935 = vmax.f32 %v1933, %v1934
    %s1936 = scalar_lea.vmem %s11, 16
    %v1937 = vld [vmem:[%s1936] sm:$0xff]
    %v1938 = vld [vmem:[%s1936 + $0x8] sm:$0xff]
    %v1939 = vmul.f32 %v1860, %v1937
    %v1940 = vmul.f32 %v1862, %v1938
    %v1941 = vmul.f32 %v1865, %v1937
    %v1942 = vmul.f32 %v1867, %v1938
    %v1943 = vmul.f32 %v1870, %v1937
    %v1944 = vmul.f32 %v1872, %v1938
    %v1945 = vmul.f32 %v1875, %v1937
    %v1946 = vmul.f32 %v1877, %v1938
    %v1947 = vmul.f32 %v1880, %v1937
    %v1948 = vmul.f32 %v1882, %v1938
    %v1949 = vmul.f32 %v1885, %v1937
    %v1950 = vmul.f32 %v1887, %v1938
    %v1951 = vsel %vm145, %v1939, -inf
    %v1952 = vsel %vm145, %v1940, -inf
    %v1953 = vmax.f32 %v1951, %v1952
    %v1954 = vrot.slane %v1953, 4
    %v1955 = vmax.f32 %v1953, %v1954
    %v1956 = vrot.slane %v1955, 2
    %v1957 = vmax.f32 %v1955, %v1956
    %v1958 = vrot.slane %v1957, 1
    %v1959 = vmax.f32 %v1957, %v1958
    %v1960 = vsel %vm145, %v1941, -inf
    %v1961 = vsel %vm145, %v1942, -inf
    %v1962 = vmax.f32 %v1960, %v1961
    %v1963 = vrot.slane %v1962, 4
    %v1964 = vmax.f32 %v1962, %v1963
    %v1965 = vrot.slane %v1964, 2
    %v1966 = vmax.f32 %v1964, %v1965
    %v1967 = vrot.slane %v1966, 1
    %v1968 = vmax.f32 %v1966, %v1967
    %v1969 = vsel %vm145, %v1943, -inf
    %v1970 = vsel %vm145, %v1944, -inf
    %v1971 = vmax.f32 %v1969, %v1970
    %v1972 = vrot.slane %v1971, 4
    %v1973 = vmax.f32 %v1971, %v1972
    %v1974 = vrot.slane %v1973, 2
    %v1975 = vmax.f32 %v1973, %v1974
    %v1976 = vrot.slane %v1975, 1
    %v1977 = vmax.f32 %v1975, %v1976
    %v1978 = vsel %vm145, %v1945, -inf
    %v1979 = vsel %vm145, %v1946, -inf
    %v1980 = vmax.f32 %v1978, %v1979
    %v1981 = vrot.slane %v1980, 4
    %v1982 = vmax.f32 %v1980, %v1981
    %v1983 = vrot.slane %v1982, 2
    %v1984 = vmax.f32 %v1982, %v1983
    %v1985 = vrot.slane %v1984, 1
    %v1986 = vmax.f32 %v1984, %v1985
    %v1987 = vsel %vm145, %v1947, -inf
    %v1988 = vsel %vm145, %v1948, -inf
    %v1989 = vmax.f32 %v1987, %v1988
    %v1990 = vrot.slane %v1989, 4
    %v1991 = vmax.f32 %v1989, %v1990
    %v1992 = vrot.slane %v1991, 2
    %v1993 = vmax.f32 %v1991, %v1992
    %v1994 = vrot.slane %v1993, 1
    %v1995 = vmax.f32 %v1993, %v1994
    %v1996 = vsel %vm145, %v1949, -inf
    %v1997 = vsel %vm145, %v1950, -inf
    %v1998 = vmax.f32 %v1996, %v1997
    %v1999 = vrot.slane %v1998, 4
    %v2000 = vmax.f32 %v1998, %v1999
    %v2001 = vrot.slane %v2000, 2
    %v2002 = vmax.f32 %v2000, %v2001
    %v2003 = vrot.slane %v2002, 1
    %v2004 = vmax.f32 %v2002, %v2003
    %s2005 = scalar_lea.vmem %s12, 2
    %v2006 = vld [vmem:[%s2005] sm:$0x3]
    %v2007 = vpack.c.bf16 %v1959, %v1959
    %v2008 = vpack.c.bf16 %v1968, %v1968
    %v2009 = vpack.c.bf16 %v1977, %v1977
    %v2010 = vpack.c.bf16 %v1986, %v1986
    %v2011 = vpack.c.bf16 %v1995, %v1995
    %v2012 = vpack.c.bf16 %v2004, %v2004
    %v2019 = vunpack.c.l.b16 %v2007
    %v2020 = vunpack.c.l.b16 %v2008
    %v2021 = vunpack.c.l.b16 %v2009
    %v2022 = vunpack.c.l.b16 %v2010
    %v2023 = vunpack.c.l.b16 %v2011
    %v2024 = vunpack.c.l.b16 %v2012
    %v2025 = vsel %vm1002, %v2020, %v2019
    %v2026 = vsel %vm1004, %v2021, %v2025
    %v2027 = vsel %vm1006, %v2022, %v2026
    %v2028 = vsel %vm1043, %v2023, %v2027
    %v2029 = vsel %vm1045, %v2024, %v2028
    %v2030 = vpack.c.b16 %v2029, %v2029
    %v2032 = vsel %vm145, %v2006, 0
    %v2035 = vsel %vm145, %v2030, 0
    %2037 = vmatpush.bf16.xpose.msra.mxu0 0
    %2038 = vmatpush.bf16.xpose.msra.mxu0 0
    %2039 = vmatpush.bf16.xpose.msra.mxu0 0
    %2040 = vmatpush.bf16.xpose.msra.mxu0 0
    %2041 = vmatpush.bf16.xpose.msra.mxu0 0
    %2042 = vmatpush.bf16.xpose.msra.mxu0 0
    %2043 = vmatpush.bf16.xpose.msra.mxu0 0
    %2044 = vmatpush.bf16.xpose.msra.mxu0 %v2035
    %2045 = vmatmul.bf16.gmra.mxu0 %v2032
    %v2046 = vpop.f32.mrf.mxu0
    %v2047 = vadd.f32 0.0, %v2046
    %v2048 = vpop.f32.mrf.mxu0
    %2049 = vdwg.mxu0
    %v2050 = vpack.c.bf16 %v1908, %v1908
    %v2051 = vpack.c.bf16 %v1917, %v1917
    %v2052 = vpack.c.bf16 %v1926, %v1926
    %v2053 = vpack.c.bf16 %v1935, %v1935
    %s2054 = scalar_lea.vmem %s13, 4
    %v2055 = vld [vmem:[%s2054] sm:$0x7]
    %v2060 = vunpack.c.l.b16 %v2050
    %v2061 = vunpack.c.l.b16 %v2051
    %v2062 = vunpack.c.l.b16 %v2052
    %v2063 = vunpack.c.l.b16 %v2053
    %v2064 = vsel %vm1002, %v2061, %v2060
    %v2065 = vsel %vm1004, %v2062, %v2064
    %v2066 = vsel %vm1006, %v2063, %v2065
    %v2067 = vpack.c.b16 %v2066, %v2066
    %v2069 = vsel %vm877, %v2067, 0
    %v2072 = vsel %vm877, %v2055, 0
    %2074 = vmatpush.bf16.xpose.msra.mxu0 0
    %2075 = vmatpush.bf16.xpose.msra.mxu0 0
    %2076 = vmatpush.bf16.xpose.msra.mxu0 0
    %2077 = vmatpush.bf16.xpose.msra.mxu0 0
    %2078 = vmatpush.bf16.xpose.msra.mxu0 0
    %2079 = vmatpush.bf16.xpose.msra.mxu0 0
    %2080 = vmatpush.bf16.xpose.msra.mxu0 0
    %2081 = vmatpush.bf16.xpose.msra.mxu0 %v2072
    %2082 = vmatmul.bf16.gmra.mxu0 %v2069
    %v2083 = vpop.f32.mrf.mxu0
    %v2084 = vadd.f32 0.0, %v2083
    %v2085 = vpop.f32.mrf.mxu0
    %2086 = vdwg.mxu0
    %v2087 = vadd.f32 %v1064, %v2047
    %v2088 = vadd.f32 %v2087, %v2084
    %s2089 = sld [smem:[#allocation2]]
    %v2090 = vstv %s2089
    %v2091 = vadd.f32 %v2088, %v2090
    %vm2092 = vcmask 44032
    %2093 = vst.msk [vmem:[#allocation3] sm:$0xf] %vm2092, %v2091
    // Predicated region
    $region62: #{tpu_custom_call.1} parent=1 // pred_check
      _
    $region63: #{tpu_custom_call.1} parent=1 // pred_check_branch
      %2095 = sbr.rel (0) target = $region65
    $region64: #{tpu_custom_call.1} parent=1 // pred_region
      %2097 = vsyncadd [#allocation4], 0
      %s2099 = sshll.u32 [#allocation3], 4
      %s2100 = int_to_ptr.vmem [resolvable:$true] %s2099
      %s2101 = sshll.u32 %s15, 4
      %s2102 = int_to_ptr.hbm [resolvable:$true] %s2101
      %2104 = dma.vmem_to_hbm [thread:$0]  %s2100, 64, %s2102, [#allocation4]
    $region65: #{tpu_custom_call.1} parent=1 // pred_fallthru
      _
    // Predicated region
    $region66: #{tpu_custom_call.1} parent=1 // pred_check
      _
    $region67: #{tpu_custom_call.1} parent=1 // pred_check_branch
      %2106 = sbr.rel (0) target = $region69
    $region68: #{tpu_custom_call.1} parent=1 // pred_region
      %2108 = dma.done [#allocation4], 64
    $region69: #{tpu_custom_call.1} parent=1 // pred_fallthru
      _
    %2109 = vsyncpa [#allocation4], 1

</llo_original>
